<compile_context>
chip_gen: v7x
topology: tpu7x:2x2x1
jax: 0.10.0
libtpu: 0.0.40
codegen_flags: <defaults>
</compile_context>

<pallas_src>
import functools
import math

import numpy as np

import jax
import jax.numpy as jnp
from jax import lax
from jax.experimental import pallas as pl
from jax.experimental.pallas import tpu as pltpu

# ---- model dimensions (small, consistent with the module's forward) --------
B, S, D = 2, 8, 32        # batch (per window), sequence length, d_model
FF = 64                   # transformer feed-forward hidden dim
C, K = 4, 5               # conv out-channels, conv kernel width
L = D - K + 1             # valid-conv output length (28)
NC = 10                   # number of chord classes
NC_PAD = 128              # lane-dense logits slab width (sliced to NC outside)
QKV_PAD = 128             # each of Q/K/V padded to its own 128-lane block
VEC_W = 128               # lane width of the packed vector-parameter slab
LN_EPS = 1e-5

# ---- grid folding ------------------------------------------------------------
W_PER_STEP = 8            # windows folded into one grid step
SEQS = W_PER_STEP * B     # sequences per grid step (16)
ROWS = SEQS * S           # rows per grid step (128) -> full MXU sublane fill

# rows of the packed vector-parameter slab (all f32, lane width 128)
(ROW_B_Q, ROW_B_K, ROW_B_V, ROW_B_O,
 ROW_B_FF1, ROW_B_FF2,
 ROW_LN1_G, ROW_LN1_B, ROW_LN2_G, ROW_LN2_B,
 ROW_B_CONV, ROW_B_FC) = range(12)
VEC_ROWS = 12


def _layer_norm(x, gamma, beta):
    mean = jnp.mean(x, axis=-1, keepdims=True)
    var = jnp.mean((x - mean) ** 2, axis=-1, keepdims=True)
    return (x - mean) * lax.rsqrt(var + LN_EPS) * gamma + beta


# --------------------------- fused joint kernel -----------------------------
def _make_kernel(run_encoder, run_classifier):
    bf16 = jnp.bfloat16

    def kernel(x_ref, wqkv_ref, wo_ref, w1_ref, w2_ref, wtoep_ref, wfc_ref,
               vec_ref, mask_ref, pool_ref, out_ref):
        x = x_ref[...]                    # (ROWS, D) f32
        vec = vec_ref[...]                # (VEC_ROWS, 128) f32

        if run_encoder:
            # --- fused, lane-aligned Q|K|V projection (scale folded into Q) --
            qkv = jnp.dot(x.astype(bf16), wqkv_ref[...],
                          preferred_element_type=jnp.float32)   # (ROWS, 3*128)
            q = qkv[:, 0 * QKV_PAD:1 * QKV_PAD] + vec[ROW_B_Q:ROW_B_Q + 1, :]
            k = qkv[:, 1 * QKV_PAD:2 * QKV_PAD] + vec[ROW_B_K:ROW_B_K + 1, :]
            v = qkv[:, 2 * QKV_PAD:3 * QKV_PAD] + vec[ROW_B_V:ROW_B_V + 1, :]

            # --- self-attention on the full (ROWS, ROWS) score matrix --------
            # sequences stay independent via the constant block-diagonal bias.
            scores = lax.dot_general(q.astype(bf16), k.astype(bf16),
                                     (((1,), (1,)), ((), ())),
                                     preferred_element_type=jnp.float32)
            scores = scores + mask_ref[...]          # additive 0 / -1e30 mask
            m = jnp.max(scores, axis=-1, keepdims=True)
            e = jnp.exp(scores - m)
            denom = jnp.sum(e, axis=-1, keepdims=True)
            attn = e * pl.reciprocal(denom, approx=True)   # EUP, not VALU div

            ao = jnp.dot(attn.astype(bf16), v.astype(bf16),
                         preferred_element_type=jnp.float32)  # (ROWS, 128)
            ao = jnp.dot(ao.astype(bf16), wo_ref[...],
                         preferred_element_type=jnp.float32)  # (ROWS, D)
            ao = ao + vec[ROW_B_O:ROW_B_O + 1, 0:D]

            h = _layer_norm(x + ao,
                            vec[ROW_LN1_G:ROW_LN1_G + 1, 0:D],
                            vec[ROW_LN1_B:ROW_LN1_B + 1, 0:D])

            # --- feed-forward -------------------------------------------------
            ff = jnp.dot(h.astype(bf16), w1_ref[...],
                         preferred_element_type=jnp.float32)
            ff = jnp.maximum(ff + vec[ROW_B_FF1:ROW_B_FF1 + 1, 0:FF], 0.0)
            ff = jnp.dot(ff.astype(bf16), w2_ref[...],
                         preferred_element_type=jnp.float32)
            ff = ff + vec[ROW_B_FF2:ROW_B_FF2 + 1, 0:D]

            h2 = _layer_norm(h + ff,
                             vec[ROW_LN2_G:ROW_LN2_G + 1, 0:D],
                             vec[ROW_LN2_B:ROW_LN2_B + 1, 0:D])
        else:
            h2 = x

        if run_classifier:
            # mean-pool each sequence with one constant (SEQS, ROWS) matmul
            pooled = jnp.dot(pool_ref[...], h2.astype(bf16),
                             preferred_element_type=jnp.float32)   # (SEQS, D)
            # valid 1-D conv over the feature axis as ONE Toeplitz matmul,
            # then the dense layer as ONE lane-dense matmul.
            conv = jnp.dot(pooled.astype(bf16), wtoep_ref[...],
                           preferred_element_type=jnp.float32)     # (SEQS, C*L)
            conv = jnp.maximum(conv + vec[ROW_B_CONV:ROW_B_CONV + 1, 0:C * L],
                               0.0)
            logits = jnp.dot(conv.astype(bf16), wfc_ref[...],
                             preferred_element_type=jnp.float32)   # (SEQS, 128)
            out_ref[...] = logits + vec[ROW_B_FC:ROW_B_FC + 1, :]
        else:
            out_ref[...] = h2

    return kernel


# ------------------------------ wrappers ------------------------------------
@functools.partial(jax.jit, static_argnums=(2, 3, 4))
def _fused_forward(xf, pp, run_encoder, run_classifier, n_steps):
    kernel = _make_kernel(run_encoder, run_classifier)

    if run_classifier:
        out_shape = jax.ShapeDtypeStruct((n_steps * SEQS, NC_PAD), jnp.float32)
        out_spec = pl.BlockSpec((SEQS, NC_PAD), lambda i: (i, 0))
    else:
        out_shape = jax.ShapeDtypeStruct((n_steps * ROWS, D), jnp.float32)
        out_spec = pl.BlockSpec((ROWS, D), lambda i: (i, 0))

    def resident(arr):  # weight slab: DMA'd once, VMEM-resident across the grid
        return pl.BlockSpec(arr.shape, lambda i: (0, 0))

    weight_keys = ("w_qkv", "w_o", "w_ff1", "w_ff2", "w_toep", "w_fc",
                   "vec", "mask", "pool")
    out = pl.pallas_call(
        kernel,
        out_shape=out_shape,
        grid_spec=pltpu.PrefetchScalarGridSpec(
            num_scalar_prefetch=0,
            grid=(n_steps,),
            in_specs=[pl.BlockSpec((ROWS, D), lambda i: (i, 0))]
                     + [resident(pp[k]) for k in weight_keys],
            out_specs=out_spec,
        ),
        compiler_params=pltpu.CompilerParams(
            dimension_semantics=("parallel",)),   # shards across v7x's 2 TCs
    )(xf, *(pp[k] for k in weight_keys))
    return out


def music_score_joint_forward(data, packed_params, stages=(0, 1)):
    """Stage 0 = encoder, stage 1 = classifier (resolved at trace time).

    `data` is (B, S, D) for a single window or (N, B, S, D) for batch inference.
    """
    run_enc = 0 in stages
    run_clf = 1 in stages
    data = jnp.asarray(data, jnp.float32)
    single = data.ndim == 3
    if single:
        data = data[None]
    n_win = data.shape[0]
    n_steps = -(-n_win // W_PER_STEP)
    pad_win = n_steps * W_PER_STEP - n_win
    if pad_win:
        data = jnp.concatenate(
            [data, jnp.zeros((pad_win, B, S, D), data.dtype)], axis=0)
    xf = data.reshape(n_steps * ROWS, D)

    out = _fused_forward(xf, packed_params, run_enc, run_clf, n_steps)
    if run_clf:
        out = out[:, :NC].reshape(n_steps * W_PER_STEP, B, NC)[:n_win]
    else:
        out = out.reshape(n_steps * W_PER_STEP, B, S, D)[:n_win]
    return out[0] if single else out


# --------------------------- parameter handling ------------------------------
def init_params(key):
    ks = jax.random.split(key, 8)

    def w(k, shape, scale=0.05):
        return jax.random.normal(k, shape, jnp.float32) * scale

    enc = {
        "wq": w(ks[0], (D, D)), "bq": jnp.zeros((1, D), jnp.float32),
        "wk": w(ks[1], (D, D)), "bk": jnp.zeros((1, D), jnp.float32),
        "wv": w(ks[2], (D, D)), "bv": jnp.zeros((1, D), jnp.float32),
        "wo": w(ks[3], (D, D)), "bo": jnp.zeros((1, D), jnp.float32),
        "ln1_g": jnp.ones((1, D), jnp.float32), "ln1_b": jnp.zeros((1, D), jnp.float32),
        "w1": w(ks[4], (D, FF)), "b1": jnp.zeros((1, FF), jnp.float32),
        "w2": w(ks[5], (FF, D)), "b2": jnp.zeros((1, D), jnp.float32),
        "ln2_g": jnp.ones((1, D), jnp.float32), "ln2_b": jnp.zeros((1, D), jnp.float32),
    }
    clf = {
        "wconv": w(ks[6], (C, K), scale=0.2),
        "bconv": jnp.zeros((C, 1), jnp.float32),
        "wfc": w(ks[7], (C * L, NC), scale=0.1),
        "bfc": jnp.zeros((1, NC), jnp.float32),
    }
    return {"encoder": enc, "classifier": clf}


def pack_params(p):
    """One-time packing into lane-aligned bf16 MXU slabs + an f32 bias slab."""
    enc, clf = p["encoder"], p["classifier"]
    inv_sqrt_d = 1.0 / math.sqrt(D)
    bf16 = jnp.bfloat16

    def row(v):
        v = jnp.asarray(v, jnp.float32).reshape(1, -1)
        return jnp.pad(v, ((0, 0), (0, VEC_W - v.shape[1])))

    vec = jnp.concatenate([
        row(enc["bq"] * inv_sqrt_d),                      # ROW_B_Q (scale folded)
        row(enc["bk"]),                                   # ROW_B_K
        row(enc["bv"]),                                   # ROW_B_V
        row(enc["bo"]),                                   # ROW_B_O
        row(enc["b1"]),                                   # ROW_B_FF1
        row(enc["b2"]),                                   # ROW_B_FF2
        row(enc["ln1_g"]), row(enc["ln1_b"]),             # LN1
        row(enc["ln2_g"]), row(enc["ln2_b"]),             # LN2
        row(jnp.repeat(clf["bconv"].reshape(C), L)),      # ROW_B_CONV
        row(clf["bfc"]),                                  # ROW_B_FC
    ], axis=0)                                            # (12, 128) f32

    def pad_to(a, shape):
        return jnp.pad(a, [(0, t - s) for s, t in zip(a.shape, shape)])

    # Lane-aligned QKV / output-projection slabs (zero-padded to 128 lanes).
    w_qkv = jnp.concatenate([
        pad_to(enc["wq"] * inv_sqrt_d, (D, QKV_PAD)),
        pad_to(enc["wk"], (D, QKV_PAD)),
        pad_to(enc["wv"], (D, QKV_PAD)),
    ], axis=1)                                            # (D, 3*128)
    w_o = pad_to(enc["wo"], (QKV_PAD, D))                 # (128, D)

    # Toeplitz matrix for the valid conv over the feature axis:
    # w_toep[d, c*L + l] = wconv[c, d - l] if 0 <= d - l < K else 0
    d_idx = jnp.arange(D)[:, None]
    l_idx = jnp.arange(L)[None, :]
    k_idx = d_idx - l_idx
    valid = (k_idx >= 0) & (k_idx < K)
    k_safe = jnp.clip(k_idx, 0, K - 1)
    toep = jnp.where(valid[None, :, :], clf["wconv"][:, k_safe], 0.0)  # (C, D, L)
    w_toep = jnp.transpose(toep, (1, 0, 2)).reshape(D, C * L)

    w_fc = jnp.pad(clf["wfc"], ((0, 0), (0, NC_PAD - NC)))  # lane-dense logits

    # Static per-step constants: block-diag attention bias + mean-pool matrix.
    seq_of_row = np.arange(ROWS) // S
    mask = np.where(seq_of_row[:, None] == seq_of_row[None, :],
                    0.0, -1e30).astype(np.float32)                       # (ROWS, ROWS)
    pool = (np.arange(SEQS)[:, None] == seq_of_row[None, :]).astype(np.float32) / S

    return {
        "w_qkv": w_qkv.astype(bf16),
        "w_o": w_o.astype(bf16),
        "w_ff1": enc["w1"].astype(bf16),
        "w_ff2": enc["w2"].astype(bf16),
        "w_toep": w_toep.astype(bf16),
        "w_fc": w_fc.astype(bf16),
        "vec": vec,                          # f32 (VPU/EUP work stays f32)
        "mask": jnp.asarray(mask),           # f32 additive bias
        "pool": jnp.asarray(pool, bf16),     # bf16 MXU operand
    }


if __name__ == "__main__":
    key = jax.random.PRNGKey(0)
    pkey, dkey = jax.random.split(key)
    params = init_params(pkey)
    packed = pack_params(params)

    # Batch-inference path: 64 windows of (B, S, D) stream through the grid
    # (8 grid steps x 8 windows = 128 rows per step) with VMEM-resident weights.
    n_windows = 64
    data = jax.random.normal(dkey, (n_windows, B, S, D), jnp.float32)
    logits = music_score_joint_forward(data, packed, stages=(0, 1))
    logits = jax.block_until_ready(logits)
    assert logits.shape == (n_windows, B, NC), logits.shape
    assert bool(jnp.all(jnp.isfinite(logits)))

    # Single-window path, matching the original (B, S, D) -> (B, NC) forward.
    one = music_score_joint_forward(data[0], packed, stages=(0, 1))
    one = jax.block_until_ready(one)
    assert one.shape == (B, NC), one.shape
    assert bool(jnp.all(jnp.isfinite(one)))
    # Window 0 is independent of the other windows (block-diag mask / pooling),
    # so the two paths must agree (tolerance for approx reciprocal / bf16).
    assert bool(jnp.allclose(one, logits[0], atol=1e-2, rtol=1e-2))

    print("KERNEL_OK")
</pallas_src>

<mosaic_0001>
module attributes {stable_mosaic.version = 11 : i64} {
  func.func @kernel(%arg0: i32, %arg1: memref<128x32xf32, #tpu.memory_space<vmem>>, %arg2: memref<32x384xbf16, #tpu.memory_space<vmem>>, %arg3: memref<128x32xbf16, #tpu.memory_space<vmem>>, %arg4: memref<32x64xbf16, #tpu.memory_space<vmem>>, %arg5: memref<64x32xbf16, #tpu.memory_space<vmem>>, %arg6: memref<32x112xbf16, #tpu.memory_space<vmem>>, %arg7: memref<112x128xbf16, #tpu.memory_space<vmem>>, %arg8: memref<12x128xf32, #tpu.memory_space<vmem>>, %arg9: memref<128x128xf32, #tpu.memory_space<vmem>>, %arg10: memref<16x128xbf16, #tpu.memory_space<vmem>>, %arg11: memref<16x128xf32, #tpu.memory_space<vmem>>) attributes {dimension_semantics = [#tpu.dimension_semantics<parallel>], iteration_bounds = array<i64: 8>, scalar_prefetch = 0 : i64, scratch_operands = 0 : i64, tpu.core_type = #tpu.core_type<tc>, window_params = [{transform_indices = @transform_0, window_bounds = array<i64: 128, 32>}, {pipeline_mode = #tpu.pipeline_mode<synchronous>, transform_indices = @transform_1, window_bounds = array<i64: 32, 384>}, {pipeline_mode = #tpu.pipeline_mode<synchronous>, transform_indices = @transform_2, window_bounds = array<i64: 128, 32>}, {pipeline_mode = #tpu.pipeline_mode<synchronous>, transform_indices = @transform_3, window_bounds = array<i64: 32, 64>}, {pipeline_mode = #tpu.pipeline_mode<synchronous>, transform_indices = @transform_4, window_bounds = array<i64: 64, 32>}, {pipeline_mode = #tpu.pipeline_mode<synchronous>, transform_indices = @transform_5, window_bounds = array<i64: 32, 112>}, {pipeline_mode = #tpu.pipeline_mode<synchronous>, transform_indices = @transform_6, window_bounds = array<i64: 112, 128>}, {pipeline_mode = #tpu.pipeline_mode<synchronous>, transform_indices = @transform_7, window_bounds = array<i64: 12, 128>}, {pipeline_mode = #tpu.pipeline_mode<synchronous>, transform_indices = @transform_8, window_bounds = array<i64: 128, 128>}, {pipeline_mode = #tpu.pipeline_mode<synchronous>, transform_indices = @transform_9, window_bounds = array<i64: 16, 128>}, {transform_indices = @transform_10, window_bounds = array<i64: 16, 128>}]} {
    %c0 = arith.constant 0 : index
    %c0_0 = arith.constant 0 : index
    %0 = vector.load %arg1[%c0, %c0_0] : memref<128x32xf32, #tpu.memory_space<vmem>>, vector<128x32xf32>
    %c0_1 = arith.constant 0 : index
    %c0_2 = arith.constant 0 : index
    %1 = vector.load %arg8[%c0_1, %c0_2] : memref<12x128xf32, #tpu.memory_space<vmem>>, vector<12x128xf32>
    %2 = arith.truncf %0 : vector<128x32xf32> to vector<128x32xbf16>
    %c0_3 = arith.constant 0 : index
    %c0_4 = arith.constant 0 : index
    %3 = vector.load %arg2[%c0_3, %c0_4] : memref<32x384xbf16, #tpu.memory_space<vmem>>, vector<32x384xbf16>
    %cst = arith.constant dense<0.000000e+00> : vector<128x384xf32>
    %4 = tpu.matmul %2, %3, %cst {dimension_numbers = #tpu.dot_dimension_numbers<[1], [0], [0], [1], [0, 0, 1, 1], [], []>} : vector<128x32xbf16>, vector<32x384xbf16>, vector<128x384xf32> -> vector<128x384xf32>
    %5 = vector.extract_strided_slice %4 {offsets = [0, 0], sizes = [128, 128], strides = [1, 1]} : vector<128x384xf32> to vector<128x128xf32>
    %6 = vector.extract_strided_slice %1 {offsets = [0, 0], sizes = [1, 128], strides = [1, 1]} : vector<12x128xf32> to vector<1x128xf32>
    %7 = vector.broadcast %6 : vector<1x128xf32> to vector<128x128xf32>
    %8 = arith.addf %5, %7 : vector<128x128xf32>
    %9 = vector.extract_strided_slice %4 {offsets = [0, 128], sizes = [128, 128], strides = [1, 1]} : vector<128x384xf32> to vector<128x128xf32>
    %10 = vector.extract_strided_slice %1 {offsets = [1, 0], sizes = [1, 128], strides = [1, 1]} : vector<12x128xf32> to vector<1x128xf32>
    %11 = vector.broadcast %10 : vector<1x128xf32> to vector<128x128xf32>
    %12 = arith.addf %9, %11 : vector<128x128xf32>
    %13 = vector.extract_strided_slice %4 {offsets = [0, 256], sizes = [128, 128], strides = [1, 1]} : vector<128x384xf32> to vector<128x128xf32>
    %14 = vector.extract_strided_slice %1 {offsets = [2, 0], sizes = [1, 128], strides = [1, 1]} : vector<12x128xf32> to vector<1x128xf32>
    %15 = vector.broadcast %14 : vector<1x128xf32> to vector<128x128xf32>
    %16 = arith.addf %13, %15 : vector<128x128xf32>
    %17 = arith.truncf %8 : vector<128x128xf32> to vector<128x128xbf16>
    %18 = arith.truncf %12 : vector<128x128xf32> to vector<128x128xbf16>
    %cst_5 = arith.constant dense<0.000000e+00> : vector<128x128xf32>
    %19 = tpu.matmul %17, %18, %cst_5 {dimension_numbers = #tpu.dot_dimension_numbers<[1], [1], [0], [0], [0, 0, 1, 0], [], []>} : vector<128x128xbf16>, vector<128x128xbf16>, vector<128x128xf32> -> vector<128x128xf32>
    %c0_6 = arith.constant 0 : index
    %c0_7 = arith.constant 0 : index
    %20 = vector.load %arg9[%c0_6, %c0_7] : memref<128x128xf32, #tpu.memory_space<vmem>>, vector<128x128xf32>
    %21 = arith.addf %19, %20 : vector<128x128xf32>
    %cst_8 = arith.constant dense<0xFF800000> : vector<128xf32>
    %22 = vector.multi_reduction <maximumf>, %21, %cst_8 [1] : vector<128x128xf32> to vector<128xf32>
    %23 = vector.shape_cast %22 : vector<128xf32> to vector<128x1xf32>
    %24 = vector.broadcast %23 : vector<128x1xf32> to vector<128x128xf32>
    %25 = arith.subf %21, %24 : vector<128x128xf32>
    %26 = math.exp %25 : vector<128x128xf32>
    %cst_9 = arith.constant dense<0.000000e+00> : vector<128xf32>
    %27 = vector.multi_reduction <add>, %26, %cst_9 [1] : vector<128x128xf32> to vector<128xf32>
    %28 = vector.shape_cast %27 : vector<128xf32> to vector<128x1xf32>
    %29 = tpu.reciprocal %28 {approx = true} : vector<128x1xf32> -> vector<128x1xf32>
    %30 = vector.broadcast %29 : vector<128x1xf32> to vector<128x128xf32>
    %31 = arith.mulf %26, %30 : vector<128x128xf32>
    %32 = arith.truncf %31 : vector<128x128xf32> to vector<128x128xbf16>
    %33 = arith.truncf %16 : vector<128x128xf32> to vector<128x128xbf16>
    %cst_10 = arith.constant dense<0.000000e+00> : vector<128x128xf32>
    %34 = tpu.matmul %32, %33, %cst_10 {dimension_numbers = #tpu.dot_dimension_numbers<[1], [0], [0], [1], [0, 0, 1, 1], [], []>} : vector<128x128xbf16>, vector<128x128xbf16>, vector<128x128xf32> -> vector<128x128xf32>
    %35 = arith.truncf %34 : vector<128x128xf32> to vector<128x128xbf16>
    %c0_11 = arith.constant 0 : index
    %c0_12 = arith.constant 0 : index
    %36 = vector.load %arg3[%c0_11, %c0_12] : memref<128x32xbf16, #tpu.memory_space<vmem>>, vector<128x32xbf16>
    %cst_13 = arith.constant dense<0.000000e+00> : vector<128x32xf32>
    %37 = tpu.matmul %35, %36, %cst_13 {dimension_numbers = #tpu.dot_dimension_numbers<[1], [0], [0], [1], [0, 0, 1, 1], [], []>} : vector<128x128xbf16>, vector<128x32xbf16>, vector<128x32xf32> -> vector<128x32xf32>
    %38 = vector.extract_strided_slice %1 {offsets = [3, 0], sizes = [1, 32], strides = [1, 1]} : vector<12x128xf32> to vector<1x32xf32>
    %39 = vector.broadcast %38 : vector<1x32xf32> to vector<128x32xf32>
    %40 = arith.addf %37, %39 : vector<128x32xf32>
    %41 = arith.addf %0, %40 : vector<128x32xf32>
    %42 = vector.extract_strided_slice %1 {offsets = [6, 0], sizes = [1, 32], strides = [1, 1]} : vector<12x128xf32> to vector<1x32xf32>
    %43 = vector.extract_strided_slice %1 {offsets = [7, 0], sizes = [1, 32], strides = [1, 1]} : vector<12x128xf32> to vector<1x32xf32>
    %cst_14 = arith.constant dense<0.000000e+00> : vector<128xf32>
    %44 = vector.multi_reduction <add>, %41, %cst_14 [1] : vector<128x32xf32> to vector<128xf32>
    %45 = vector.shape_cast %44 : vector<128xf32> to vector<128x1xf32>
    %cst_15 = arith.constant 3.200000e+01 : f32
    %46 = vector.broadcast %cst_15 : f32 to vector<128x1xf32>
    %47 = arith.divf %45, %46 : vector<128x1xf32>
    %48 = vector.broadcast %47 : vector<128x1xf32> to vector<128x32xf32>
    %49 = arith.subf %41, %48 : vector<128x32xf32>
    %50 = arith.mulf %49, %49 : vector<128x32xf32>
    %cst_16 = arith.constant dense<0.000000e+00> : vector<128xf32>
    %51 = vector.multi_reduction <add>, %50, %cst_16 [1] : vector<128x32xf32> to vector<128xf32>
    %52 = vector.shape_cast %51 : vector<128xf32> to vector<128x1xf32>
    %cst_17 = arith.constant 3.200000e+01 : f32
    %53 = vector.broadcast %cst_17 : f32 to vector<128x1xf32>
    %54 = arith.divf %52, %53 : vector<128x1xf32>
    %55 = vector.broadcast %47 : vector<128x1xf32> to vector<128x32xf32>
    %56 = arith.subf %41, %55 : vector<128x32xf32>
    %cst_18 = arith.constant 9.99999974E-6 : f32
    %57 = vector.broadcast %cst_18 : f32 to vector<128x1xf32>
    %58 = arith.addf %54, %57 : vector<128x1xf32>
    %59 = math.rsqrt %58 : vector<128x1xf32>
    %60 = vector.broadcast %59 : vector<128x1xf32> to vector<128x32xf32>
    %61 = arith.mulf %56, %60 : vector<128x32xf32>
    %62 = vector.broadcast %42 : vector<1x32xf32> to vector<128x32xf32>
    %63 = arith.mulf %61, %62 : vector<128x32xf32>
    %64 = vector.broadcast %43 : vector<1x32xf32> to vector<128x32xf32>
    %65 = arith.addf %63, %64 : vector<128x32xf32>
    %66 = arith.truncf %65 : vector<128x32xf32> to vector<128x32xbf16>
    %c0_19 = arith.constant 0 : index
    %c0_20 = arith.constant 0 : index
    %67 = vector.load %arg4[%c0_19, %c0_20] : memref<32x64xbf16, #tpu.memory_space<vmem>>, vector<32x64xbf16>
    %cst_21 = arith.constant dense<0.000000e+00> : vector<128x64xf32>
    %68 = tpu.matmul %66, %67, %cst_21 {dimension_numbers = #tpu.dot_dimension_numbers<[1], [0], [0], [1], [0, 0, 1, 1], [], []>} : vector<128x32xbf16>, vector<32x64xbf16>, vector<128x64xf32> -> vector<128x64xf32>
    %69 = vector.extract_strided_slice %1 {offsets = [4, 0], sizes = [1, 64], strides = [1, 1]} : vector<12x128xf32> to vector<1x64xf32>
    %70 = vector.broadcast %69 : vector<1x64xf32> to vector<128x64xf32>
    %71 = arith.addf %68, %70 : vector<128x64xf32>
    %cst_22 = arith.constant 0.000000e+00 : f32
    %72 = vector.broadcast %cst_22 : f32 to vector<128x64xf32>
    %73 = arith.maximumf %71, %72 : vector<128x64xf32>
    %74 = arith.truncf %73 : vector<128x64xf32> to vector<128x64xbf16>
    %c0_23 = arith.constant 0 : index
    %c0_24 = arith.constant 0 : index
    %75 = vector.load %arg5[%c0_23, %c0_24] : memref<64x32xbf16, #tpu.memory_space<vmem>>, vector<64x32xbf16>
    %cst_25 = arith.constant dense<0.000000e+00> : vector<128x32xf32>
    %76 = tpu.matmul %74, %75, %cst_25 {dimension_numbers = #tpu.dot_dimension_numbers<[1], [0], [0], [1], [0, 0, 1, 1], [], []>} : vector<128x64xbf16>, vector<64x32xbf16>, vector<128x32xf32> -> vector<128x32xf32>
    %77 = vector.extract_strided_slice %1 {offsets = [5, 0], sizes = [1, 32], strides = [1, 1]} : vector<12x128xf32> to vector<1x32xf32>
    %78 = vector.broadcast %77 : vector<1x32xf32> to vector<128x32xf32>
    %79 = arith.addf %76, %78 : vector<128x32xf32>
    %80 = arith.addf %65, %79 : vector<128x32xf32>
    %81 = vector.extract_strided_slice %1 {offsets = [8, 0], sizes = [1, 32], strides = [1, 1]} : vector<12x128xf32> to vector<1x32xf32>
    %82 = vector.extract_strided_slice %1 {offsets = [9, 0], sizes = [1, 32], strides = [1, 1]} : vector<12x128xf32> to vector<1x32xf32>
    %cst_26 = arith.constant dense<0.000000e+00> : vector<128xf32>
    %83 = vector.multi_reduction <add>, %80, %cst_26 [1] : vector<128x32xf32> to vector<128xf32>
    %84 = vector.shape_cast %83 : vector<128xf32> to vector<128x1xf32>
    %cst_27 = arith.constant 3.200000e+01 : f32
    %85 = vector.broadcast %cst_27 : f32 to vector<128x1xf32>
    %86 = arith.divf %84, %85 : vector<128x1xf32>
    %87 = vector.broadcast %86 : vector<128x1xf32> to vector<128x32xf32>
    %88 = arith.subf %80, %87 : vector<128x32xf32>
    %89 = arith.mulf %88, %88 : vector<128x32xf32>
    %cst_28 = arith.constant dense<0.000000e+00> : vector<128xf32>
    %90 = vector.multi_reduction <add>, %89, %cst_28 [1] : vector<128x32xf32> to vector<128xf32>
    %91 = vector.shape_cast %90 : vector<128xf32> to vector<128x1xf32>
    %cst_29 = arith.constant 3.200000e+01 : f32
    %92 = vector.broadcast %cst_29 : f32 to vector<128x1xf32>
    %93 = arith.divf %91, %92 : vector<128x1xf32>
    %94 = vector.broadcast %86 : vector<128x1xf32> to vector<128x32xf32>
    %95 = arith.subf %80, %94 : vector<128x32xf32>
    %cst_30 = arith.constant 9.99999974E-6 : f32
    %96 = vector.broadcast %cst_30 : f32 to vector<128x1xf32>
    %97 = arith.addf %93, %96 : vector<128x1xf32>
    %98 = math.rsqrt %97 : vector<128x1xf32>
    %99 = vector.broadcast %98 : vector<128x1xf32> to vector<128x32xf32>
    %100 = arith.mulf %95, %99 : vector<128x32xf32>
    %101 = vector.broadcast %81 : vector<1x32xf32> to vector<128x32xf32>
    %102 = arith.mulf %100, %101 : vector<128x32xf32>
    %103 = vector.broadcast %82 : vector<1x32xf32> to vector<128x32xf32>
    %104 = arith.addf %102, %103 : vector<128x32xf32>
    %c0_31 = arith.constant 0 : index
    %c0_32 = arith.constant 0 : index
    %105 = vector.load %arg10[%c0_31, %c0_32] : memref<16x128xbf16, #tpu.memory_space<vmem>>, vector<16x128xbf16>
    %106 = arith.truncf %104 : vector<128x32xf32> to vector<128x32xbf16>
    %cst_33 = arith.constant dense<0.000000e+00> : vector<16x32xf32>
    %107 = tpu.matmul %105, %106, %cst_33 {dimension_numbers = #tpu.dot_dimension_numbers<[1], [0], [0], [1], [0, 0, 1, 1], [], []>} : vector<16x128xbf16>, vector<128x32xbf16>, vector<16x32xf32> -> vector<16x32xf32>
    %108 = arith.truncf %107 : vector<16x32xf32> to vector<16x32xbf16>
    %c0_34 = arith.constant 0 : index
    %c0_35 = arith.constant 0 : index
    %109 = vector.load %arg6[%c0_34, %c0_35] : memref<32x112xbf16, #tpu.memory_space<vmem>>, vector<32x112xbf16>
    %cst_36 = arith.constant dense<0.000000e+00> : vector<16x112xf32>
    %110 = tpu.matmul %108, %109, %cst_36 {dimension_numbers = #tpu.dot_dimension_numbers<[1], [0], [0], [1], [0, 0, 1, 1], [], []>} : vector<16x32xbf16>, vector<32x112xbf16>, vector<16x112xf32> -> vector<16x112xf32>
    %111 = vector.extract_strided_slice %1 {offsets = [10, 0], sizes = [1, 112], strides = [1, 1]} : vector<12x128xf32> to vector<1x112xf32>
    %112 = vector.broadcast %111 : vector<1x112xf32> to vector<16x112xf32>
    %113 = arith.addf %110, %112 : vector<16x112xf32>
    %cst_37 = arith.constant 0.000000e+00 : f32
    %114 = vector.broadcast %cst_37 : f32 to vector<16x112xf32>
    %115 = arith.maximumf %113, %114 : vector<16x112xf32>
    %116 = arith.truncf %115 : vector<16x112xf32> to vector<16x112xbf16>
    %c0_38 = arith.constant 0 : index
    %c0_39 = arith.constant 0 : index
    %117 = vector.load %arg7[%c0_38, %c0_39] : memref<112x128xbf16, #tpu.memory_space<vmem>>, vector<112x128xbf16>
    %cst_40 = arith.constant dense<0.000000e+00> : vector<16x128xf32>
    %118 = tpu.matmul %116, %117, %cst_40 {dimension_numbers = #tpu.dot_dimension_numbers<[1], [0], [0], [1], [0, 0, 1, 1], [], []>} : vector<16x112xbf16>, vector<112x128xbf16>, vector<16x128xf32> -> vector<16x128xf32>
    %119 = vector.extract_strided_slice %1 {offsets = [11, 0], sizes = [1, 128], strides = [1, 1]} : vector<12x128xf32> to vector<1x128xf32>
    %120 = vector.broadcast %119 : vector<1x128xf32> to vector<16x128xf32>
    %121 = arith.addf %118, %120 : vector<16x128xf32>
    %c0_41 = arith.constant 0 : index
    %c0_42 = arith.constant 0 : index
    %122 = vector.load %arg11[%c0_41, %c0_42] : memref<16x128xf32, #tpu.memory_space<vmem>>, vector<16x128xf32>
    tpu.vector_store %arg11[%c0_41, %c0_42], %121 {strides = array<i32>} : memref<16x128xf32, #tpu.memory_space<vmem>>, vector<16x128xf32>,
    return
  }
  func.func @transform_0(%arg0: i32) -> (i32, i32) {
    %c0_i32 = arith.constant 0 : i32
    %c0_i32_0 = arith.constant 0 : i32
    return %arg0, %c0_i32 : i32, i32
  }
  func.func @transform_1(%arg0: i32) -> (i32, i32) {
    %c0_i32 = arith.constant 0 : i32
    %c0_i32_0 = arith.constant 0 : i32
    %c0_i32_1 = arith.constant 0 : i32
    return %c0_i32, %c0_i32_0 : i32, i32
  }
  func.func @transform_2(%arg0: i32) -> (i32, i32) {
    %c0_i32 = arith.constant 0 : i32
    %c0_i32_0 = arith.constant 0 : i32
    %c0_i32_1 = arith.constant 0 : i32
    return %c0_i32, %c0_i32_0 : i32, i32
  }
  func.func @transform_3(%arg0: i32) -> (i32, i32) {
    %c0_i32 = arith.constant 0 : i32
    %c0_i32_0 = arith.constant 0 : i32
    %c0_i32_1 = arith.constant 0 : i32
    return %c0_i32, %c0_i32_0 : i32, i32
  }
  func.func @transform_4(%arg0: i32) -> (i32, i32) {
    %c0_i32 = arith.constant 0 : i32
    %c0_i32_0 = arith.constant 0 : i32
    %c0_i32_1 = arith.constant 0 : i32
    return %c0_i32, %c0_i32_0 : i32, i32
  }
  func.func @transform_5(%arg0: i32) -> (i32, i32) {
    %c0_i32 = arith.constant 0 : i32
    %c0_i32_0 = arith.constant 0 : i32
    %c0_i32_1 = arith.constant 0 : i32
    return %c0_i32, %c0_i32_0 : i32, i32
  }
  func.func @transform_6(%arg0: i32) -> (i32, i32) {
    %c0_i32 = arith.constant 0 : i32
    %c0_i32_0 = arith.constant 0 : i32
    %c0_i32_1 = arith.constant 0 : i32
    return %c0_i32, %c0_i32_0 : i32, i32
  }
  func.func @transform_7(%arg0: i32) -> (i32, i32) {
    %c0_i32 = arith.constant 0 : i32
    %c0_i32_0 = arith.constant 0 : i32
    %c0_i32_1 = arith.constant 0 : i32
    return %c0_i32, %c0_i32_0 : i32, i32
  }
  func.func @transform_8(%arg0: i32) -> (i32, i32) {
    %c0_i32 = arith.constant 0 : i32
    %c0_i32_0 = arith.constant 0 : i32
    %c0_i32_1 = arith.constant 0 : i32
    return %c0_i32, %c0_i32_0 : i32, i32
  }
  func.func @transform_9(%arg0: i32) -> (i32, i32) {
    %c0_i32 = arith.constant 0 : i32
    %c0_i32_0 = arith.constant 0 : i32
    %c0_i32_1 = arith.constant 0 : i32
    return %c0_i32, %c0_i32_0 : i32, i32
  }
  func.func @transform_10(%arg0: i32) -> (i32, i32) {
    %c0_i32 = arith.constant 0 : i32
    %c0_i32_0 = arith.constant 0 : i32
    return %arg0, %c0_i32 : i32, i32
  }
}

</mosaic_0001>

<llo_original>
// kernel: _fused_forward.1
$region0: #{_fused_forward.1}
  #allocation0 [shape = 'u32[]', space=smem, size = 0x4, offset = 0x4, fixed_abs, tag = 'smem constant byte address 0x4 - core index']
  #allocation1 [shape = 'u32[144,128]{1,0:T(1,128)}', space=vmem, size = 0x12000, scoped, tag = 'internal scratch']
  %s0 = inlined_call_operand.vmem [shape: f32[1024,32], index: 0, kind: input, shape index: {}]
  %s1 = inlined_call_operand.vmem [shape: bf16[32,384], index: 1, kind: input, shape index: {}]
  %s2 = inlined_call_operand.vmem [shape: bf16[128,32], index: 2, kind: input, shape index: {}]
  %s3 = inlined_call_operand.vmem [shape: bf16[32,64], index: 3, kind: input, shape index: {}]
  %s4 = inlined_call_operand.vmem [shape: bf16[64,32], index: 4, kind: input, shape index: {}]
  %s5 = inlined_call_operand.vmem [shape: bf16[32,112], index: 5, kind: input, shape index: {}]
  %s6 = inlined_call_operand.vmem [shape: bf16[112,128], index: 6, kind: input, shape index: {}]
  %s7 = inlined_call_operand.vmem [shape: f32[12,128], index: 7, kind: input, shape index: {}]
  %s8 = inlined_call_operand.vmem [shape: f32[128,128], index: 8, kind: input, shape index: {}]
  %s9 = inlined_call_operand.vmem [shape: bf16[16,128], index: 9, kind: input, shape index: {}]
  %s10 = inlined_call_operand.hbm [shape: f32[128,128], index: 10, kind: output, shape index: {}]
  %s11 = sld [smem:[#allocation0]]
  $region73: #{_fused_forward.1} parent=0
    _
  %s13 = ssub.s32 1, %s11
  %s14 = scalar_select 0, %s13, %s11
  $region1: #{_fused_forward.1} parent=0
    #allocation2 [shape = 'u8[16384]{0}', space=vmem, size = 0x4000, scoped, tag = 'output window, operand 0']
    #allocation3 [shape = 's32[2]{0}', space=sflag, size = 0x8, scoped, tag = 'scoped memory for _fused_forward.1']
    %15 = vsyncpa [#allocation3], 0
    %s16 = scalar_lea.sflag [#allocation3], 1
    %17 = vsyncpa %s16, 0
    loop: start=0, step=1, limit=10
    $region2: #{_fused_forward.1} parent=1 // loop_pre_header
      _
    $region3: #{_fused_forward.1} parent=1 // loop_header
      %s19 = sphi 0, %s23
      %p20 = scmp.ge.s32.totalorder %s19, 10
      %s29 = sphi 0, %s31
      %s32 = sphi 0, %s29
      %s33 = sphi 0, %s32
      %s49 = sphi 0, %s33
      %s53 = sphi 0, %s53
      %s55 = sphi 0, %s53
      %s56 = sphi 0, %s55
      %s70 = sphi 0, %s56
      %s74 = sphi 0, %s74
      %s76 = sphi 0, %s74
      %s77 = sphi 0, %s76
      %s91 = sphi 0, %s77
      %s95 = sphi 0, %s95
      %s97 = sphi 0, %s95
      %s98 = sphi 0, %s97
      %s112 = sphi 0, %s98
      %s116 = sphi 0, %s116
      %s118 = sphi 0, %s116
      %s119 = sphi 0, %s118
      %s133 = sphi 0, %s119
      %s137 = sphi 0, %s137
      %s139 = sphi 0, %s137
      %s140 = sphi 0, %s139
      %s154 = sphi 0, %s140
      %s158 = sphi 0, %s158
      %s160 = sphi 0, %s158
      %s161 = sphi 0, %s160
      %s175 = sphi 0, %s161
      %s179 = sphi 0, %s179
      %s181 = sphi 0, %s179
      %s182 = sphi 0, %s181
      %s196 = sphi 0, %s182
      %s200 = sphi 0, %s200
      %s202 = sphi 0, %s200
      %s203 = sphi 0, %s202
      %s217 = sphi 0, %s203
      %s221 = sphi 0, %s221
      %s223 = sphi 0, %s221
      %s224 = sphi 0, %s223
      %s238 = sphi 0, %s224
      %s244 = sphi 0, %s246
      %s247 = sphi 0, %s244
      %s248 = sphi 0, %s247
      %s264 = sphi 0, %s248
    $region4: #{_fused_forward.1} parent=1 // loop_header_branch
      %22 = sbr.rel (%p20) target = $region8
    $region5: #{_fused_forward.1} parent=1 // loop_body
      %s24 = ssub.s32 %s19, 1
      %s25 = ssub.s32 %s19, 2
      %s26 = sadd.s32 %s19, 1
      %s27 = ssub.s32 %s19, %s26
      %p28 = scmp.eq.s32.totalorder %s27, 0
      %s30 = sadd.s32 %s29, 1
      %s31 = scalar_select %p28, %s29, %s30
      %p34 = pneg %p28
      %p35 = scmp.eq.s32.totalorder %s19, 7
      %p36 = por %p34, %p35
      %p37 = scmp.ne.s32.totalorder %s29, %s32
      %p38 = scmp.eq.s32.totalorder %s19, 0
      %p39 = por %p37, %p38
      %p40 = scmp.ne.s32.totalorder %s29, %s32
      %p41 = scmp.eq.s32.totalorder %s24, 7
      %p42 = por %p40, %p41
      %p43 = scmp.ne.s32.totalorder %s32, %s33
      %p44 = scmp.eq.s32.totalorder %s24, 0
      %p45 = por %p43, %p44
      %p46 = scmp.ne.s32.totalorder %s32, %s33
      %p47 = scmp.eq.s32.totalorder %s25, 7
      %p48 = por %p46, %p47
      %p50 = scmp.ne.s32.totalorder %s33, %s49
      %p51 = scmp.eq.s32.totalorder %s25, 0
      %p52 = por %p50, %p51
      %s54 = sadd.s32 %s53, 1
      %p57 = scmp.eq.s32.totalorder %s19, 7
      %p58 = scmp.ne.s32.totalorder %s53, %s55
      %p59 = scmp.eq.s32.totalorder %s19, 0
      %p60 = por %p58, %p59
      %p61 = scmp.ne.s32.totalorder %s53, %s55
      %p62 = scmp.eq.s32.totalorder %s24, 7
      %p63 = por %p61, %p62
      %p64 = scmp.ne.s32.totalorder %s55, %s56
      %p65 = scmp.eq.s32.totalorder %s24, 0
      %p66 = por %p64, %p65
      %p67 = scmp.ne.s32.totalorder %s55, %s56
      %p68 = scmp.eq.s32.totalorder %s25, 7
      %p69 = por %p67, %p68
      %p71 = scmp.ne.s32.totalorder %s56, %s70
      %p72 = scmp.eq.s32.totalorder %s25, 0
      %p73 = por %p71, %p72
      %s75 = sadd.s32 %s74, 1
      %p78 = scmp.eq.s32.totalorder %s19, 7
      %p79 = scmp.ne.s32.totalorder %s74, %s76
      %p80 = scmp.eq.s32.totalorder %s19, 0
      %p81 = por %p79, %p80
      %p82 = scmp.ne.s32.totalorder %s74, %s76
      %p83 = scmp.eq.s32.totalorder %s24, 7
      %p84 = por %p82, %p83
      %p85 = scmp.ne.s32.totalorder %s76, %s77
      %p86 = scmp.eq.s32.totalorder %s24, 0
      %p87 = por %p85, %p86
      %p88 = scmp.ne.s32.totalorder %s76, %s77
      %p89 = scmp.eq.s32.totalorder %s25, 7
      %p90 = por %p88, %p89
      %p92 = scmp.ne.s32.totalorder %s77, %s91
      %p93 = scmp.eq.s32.totalorder %s25, 0
      %p94 = por %p92, %p93
      %s96 = sadd.s32 %s95, 1
      %p99 = scmp.eq.s32.totalorder %s19, 7
      %p100 = scmp.ne.s32.totalorder %s95, %s97
      %p101 = scmp.eq.s32.totalorder %s19, 0
      %p102 = por %p100, %p101
      %p103 = scmp.ne.s32.totalorder %s95, %s97
      %p104 = scmp.eq.s32.totalorder %s24, 7
      %p105 = por %p103, %p104
      %p106 = scmp.ne.s32.totalorder %s97, %s98
      %p107 = scmp.eq.s32.totalorder %s24, 0
      %p108 = por %p106, %p107
      %p109 = scmp.ne.s32.totalorder %s97, %s98
      %p110 = scmp.eq.s32.totalorder %s25, 7
      %p111 = por %p109, %p110
      %p113 = scmp.ne.s32.totalorder %s98, %s112
      %p114 = scmp.eq.s32.totalorder %s25, 0
      %p115 = por %p113, %p114
      %s117 = sadd.s32 %s116, 1
      %p120 = scmp.eq.s32.totalorder %s19, 7
      %p121 = scmp.ne.s32.totalorder %s116, %s118
      %p122 = scmp.eq.s32.totalorder %s19, 0
      %p123 = por %p121, %p122
      %p124 = scmp.ne.s32.totalorder %s116, %s118
      %p125 = scmp.eq.s32.totalorder %s24, 7
      %p126 = por %p124, %p125
      %p127 = scmp.ne.s32.totalorder %s118, %s119
      %p128 = scmp.eq.s32.totalorder %s24, 0
      %p129 = por %p127, %p128
      %p130 = scmp.ne.s32.totalorder %s118, %s119
      %p131 = scmp.eq.s32.totalorder %s25, 7
      %p132 = por %p130, %p131
      %p134 = scmp.ne.s32.totalorder %s119, %s133
      %p135 = scmp.eq.s32.totalorder %s25, 0
      %p136 = por %p134, %p135
      %s138 = sadd.s32 %s137, 1
      %p141 = scmp.eq.s32.totalorder %s19, 7
      %p142 = scmp.ne.s32.totalorder %s137, %s139
      %p143 = scmp.eq.s32.totalorder %s19, 0
      %p144 = por %p142, %p143
      %p145 = scmp.ne.s32.totalorder %s137, %s139
      %p146 = scmp.eq.s32.totalorder %s24, 7
      %p147 = por %p145, %p146
      %p148 = scmp.ne.s32.totalorder %s139, %s140
      %p149 = scmp.eq.s32.totalorder %s24, 0
      %p150 = por %p148, %p149
      %p151 = scmp.ne.s32.totalorder %s139, %s140
      %p152 = scmp.eq.s32.totalorder %s25, 7
      %p153 = por %p151, %p152
      %p155 = scmp.ne.s32.totalorder %s140, %s154
      %p156 = scmp.eq.s32.totalorder %s25, 0
      %p157 = por %p155, %p156
      %s159 = sadd.s32 %s158, 1
      %p162 = scmp.eq.s32.totalorder %s19, 7
      %p163 = scmp.ne.s32.totalorder %s158, %s160
      %p164 = scmp.eq.s32.totalorder %s19, 0
      %p165 = por %p163, %p164
      %p166 = scmp.ne.s32.totalorder %s158, %s160
      %p167 = scmp.eq.s32.totalorder %s24, 7
      %p168 = por %p166, %p167
      %p169 = scmp.ne.s32.totalorder %s160, %s161
      %p170 = scmp.eq.s32.totalorder %s24, 0
      %p171 = por %p169, %p170
      %p172 = scmp.ne.s32.totalorder %s160, %s161
      %p173 = scmp.eq.s32.totalorder %s25, 7
      %p174 = por %p172, %p173
      %p176 = scmp.ne.s32.totalorder %s161, %s175
      %p177 = scmp.eq.s32.totalorder %s25, 0
      %p178 = por %p176, %p177
      %s180 = sadd.s32 %s179, 1
      %p183 = scmp.eq.s32.totalorder %s19, 7
      %p184 = scmp.ne.s32.totalorder %s179, %s181
      %p185 = scmp.eq.s32.totalorder %s19, 0
      %p186 = por %p184, %p185
      %p187 = scmp.ne.s32.totalorder %s179, %s181
      %p188 = scmp.eq.s32.totalorder %s24, 7
      %p189 = por %p187, %p188
      %p190 = scmp.ne.s32.totalorder %s181, %s182
      %p191 = scmp.eq.s32.totalorder %s24, 0
      %p192 = por %p190, %p191
      %p193 = scmp.ne.s32.totalorder %s181, %s182
      %p194 = scmp.eq.s32.totalorder %s25, 7
      %p195 = por %p193, %p194
      %p197 = scmp.ne.s32.totalorder %s182, %s196
      %p198 = scmp.eq.s32.totalorder %s25, 0
      %p199 = por %p197, %p198
      %s201 = sadd.s32 %s200, 1
      %p204 = scmp.eq.s32.totalorder %s19, 7
      %p205 = scmp.ne.s32.totalorder %s200, %s202
      %p206 = scmp.eq.s32.totalorder %s19, 0
      %p207 = por %p205, %p206
      %p208 = scmp.ne.s32.totalorder %s200, %s202
      %p209 = scmp.eq.s32.totalorder %s24, 7
      %p210 = por %p208, %p209
      %p211 = scmp.ne.s32.totalorder %s202, %s203
      %p212 = scmp.eq.s32.totalorder %s24, 0
      %p213 = por %p211, %p212
      %p214 = scmp.ne.s32.totalorder %s202, %s203
      %p215 = scmp.eq.s32.totalorder %s25, 7
      %p216 = por %p214, %p215
      %p218 = scmp.ne.s32.totalorder %s203, %s217
      %p219 = scmp.eq.s32.totalorder %s25, 0
      %p220 = por %p218, %p219
      %s222 = sadd.s32 %s221, 1
      %p225 = scmp.eq.s32.totalorder %s19, 7
      %p226 = scmp.ne.s32.totalorder %s221, %s223
      %p227 = scmp.eq.s32.totalorder %s19, 0
      %p228 = por %p226, %p227
      %p229 = scmp.ne.s32.totalorder %s221, %s223
      %p230 = scmp.eq.s32.totalorder %s24, 7
      %p231 = por %p229, %p230
      %p232 = scmp.ne.s32.totalorder %s223, %s224
      %p233 = scmp.eq.s32.totalorder %s24, 0
      %p234 = por %p232, %p233
      %p235 = scmp.ne.s32.totalorder %s223, %s224
      %p236 = scmp.eq.s32.totalorder %s25, 7
      %p237 = por %p235, %p236
      %p239 = scmp.ne.s32.totalorder %s224, %s238
      %p240 = scmp.eq.s32.totalorder %s25, 0
      %p241 = por %p239, %p240
      %s242 = ssub.s32 %s19, %s26
      %p243 = scmp.eq.s32.totalorder %s242, 0
      %s245 = sadd.s32 %s244, 1
      %s246 = scalar_select %p243, %s244, %s245
      %p249 = pneg %p243
      %p250 = scmp.eq.s32.totalorder %s19, 7
      %p251 = por %p249, %p250
      %p252 = scmp.ne.s32.totalorder %s244, %s247
      %p253 = scmp.eq.s32.totalorder %s19, 0
      %p254 = por %p252, %p253
      %p255 = scmp.ne.s32.totalorder %s244, %s247
      %p256 = scmp.eq.s32.totalorder %s24, 7
      %p257 = por %p255, %p256
      %p258 = scmp.ne.s32.totalorder %s247, %s248
      %p259 = scmp.eq.s32.totalorder %s24, 0
      %p260 = por %p258, %p259
      %p261 = scmp.ne.s32.totalorder %s247, %s248
      %p262 = scmp.eq.s32.totalorder %s25, 7
      %p263 = por %p261, %p262
      %p265 = scmp.ne.s32.totalorder %s248, %s264
      %p266 = scmp.eq.s32.totalorder %s25, 0
      %p267 = por %p265, %p266
      %p268 = scmp.le.s32.totalorder 1, %s19
      %p269 = scmp.lt.s32.totalorder %s19, 9
      %p270 = pnand %p268, %p269
      %p271 = pneg %p270
      // Predicated region
      $region9: #{_fused_forward.1} parent=5 // pred_check
        _
      $region10: #{_fused_forward.1} parent=5 // pred_check_branch
        %273 = sbr.rel (%p270) target = $region12
      $region11: #{_fused_forward.1} parent=5 // pred_region
        %s274 = ssub.s32 %s19, 1
        // Predicated region
        $region13: #{_fused_forward.1} parent=11 // pred_check
          %p275 = pneg %p66
        $region14: #{_fused_forward.1} parent=11 // pred_check_branch
          %277 = sbr.rel (%p275) target = $region16
        $region15: #{_fused_forward.1} parent=11 // pred_region
          _
        $region16: #{_fused_forward.1} parent=11 // pred_fallthru
          _
        // Predicated region
        $region17: #{_fused_forward.1} parent=11 // pred_check
          %p278 = pneg %p87
        $region18: #{_fused_forward.1} parent=11 // pred_check_branch
          %280 = sbr.rel (%p278) target = $region20
        $region19: #{_fused_forward.1} parent=11 // pred_region
          _
        $region20: #{_fused_forward.1} parent=11 // pred_fallthru
          _
        // Predicated region
        $region21: #{_fused_forward.1} parent=11 // pred_check
          %p281 = pneg %p108
        $region22: #{_fused_forward.1} parent=11 // pred_check_branch
          %283 = sbr.rel (%p281) target = $region24
        $region23: #{_fused_forward.1} parent=11 // pred_region
          _
        $region24: #{_fused_forward.1} parent=11 // pred_fallthru
          _
        // Predicated region
        $region25: #{_fused_forward.1} parent=11 // pred_check
          %p284 = pneg %p129
        $region26: #{_fused_forward.1} parent=11 // pred_check_branch
          %286 = sbr.rel (%p284) target = $region28
        $region27: #{_fused_forward.1} parent=11 // pred_region
          _
        $region28: #{_fused_forward.1} parent=11 // pred_fallthru
          _
        // Predicated region
        $region29: #{_fused_forward.1} parent=11 // pred_check
          %p287 = pneg %p150
        $region30: #{_fused_forward.1} parent=11 // pred_check_branch
          %289 = sbr.rel (%p287) target = $region32
        $region31: #{_fused_forward.1} parent=11 // pred_region
          _
        $region32: #{_fused_forward.1} parent=11 // pred_fallthru
          _
        // Predicated region
        $region33: #{_fused_forward.1} parent=11 // pred_check
          %p290 = pneg %p171
        $region34: #{_fused_forward.1} parent=11 // pred_check_branch
          %292 = sbr.rel (%p290) target = $region36
        $region35: #{_fused_forward.1} parent=11 // pred_region
          _
        $region36: #{_fused_forward.1} parent=11 // pred_fallthru
          _
        // Predicated region
        $region37: #{_fused_forward.1} parent=11 // pred_check
          %p293 = pneg %p192
        $region38: #{_fused_forward.1} parent=11 // pred_check_branch
          %295 = sbr.rel (%p293) target = $region40
        $region39: #{_fused_forward.1} parent=11 // pred_region
          _
        $region40: #{_fused_forward.1} parent=11 // pred_fallthru
          _
        // Predicated region
        $region41: #{_fused_forward.1} parent=11 // pred_check
          %p296 = pneg %p213
        $region42: #{_fused_forward.1} parent=11 // pred_check_branch
          %298 = sbr.rel (%p296) target = $region44
        $region43: #{_fused_forward.1} parent=11 // pred_region
          _
        $region44: #{_fused_forward.1} parent=11 // pred_fallthru
          _
        // Predicated region
        $region45: #{_fused_forward.1} parent=11 // pred_check
          %p299 = pneg %p234
        $region46: #{_fused_forward.1} parent=11 // pred_check_branch
          %301 = sbr.rel (%p299) target = $region48
        $region47: #{_fused_forward.1} parent=11 // pred_region
          _
        $region48: #{_fused_forward.1} parent=11 // pred_fallthru
          _
      $region12: #{_fused_forward.1} parent=5 // pred_fallthru
        _
      %p302 = scmp.lt.s32.totalorder %s19, 8
      // Predicated region
      $region49: #{_fused_forward.1} parent=5 // pred_check
        %p303 = pneg %p302
      $region50: #{_fused_forward.1} parent=5 // pred_check_branch
        %305 = sbr.rel (%p303) target = $region52
      $region51: #{_fused_forward.1} parent=5 // pred_region
        // Predicated region
        $region53: #{_fused_forward.1} parent=51 // pred_check
          %p306 = pneg %p39
        $region54: #{_fused_forward.1} parent=51 // pred_check_branch
          %308 = sbr.rel (%p306) target = $region56
        $region55: #{_fused_forward.1} parent=51 // pred_region
          %s309 = smul.u32 16, %s19
          %p310 = scmp.lt.s32.totalorder %s309, 127
          %s311 = scalar_select %p310, %s309, 127
          %s312 = smul.addr %s311, 8
          %s313 = scalar_lea.vmem %s0, %s312
          %s314 = smul.u32 16, %s19
        $region56: #{_fused_forward.1} parent=51 // pred_fallthru
          _
      $region52: #{_fused_forward.1} parent=5 // pred_fallthru
        _
      %p315 = scmp.le.s32.totalorder 1, %s19
      %p316 = scmp.lt.s32.totalorder %s19, 9
      %p317 = pnand %p315, %p316
      %p318 = pneg %p317
      // Predicated region
      $region57: #{_fused_forward.1} parent=5 // pred_check
        _
      $region58: #{_fused_forward.1} parent=5 // pred_check_branch
        %320 = sbr.rel (%p317) target = $region60
      $region59: #{_fused_forward.1} parent=5 // pred_region
        %s321 = ssub.s32 %s19, 1
        %s322 = smul.u32 16, %s24
        %p323 = scmp.lt.s32.totalorder %s322, 127
        %s324 = scalar_select %p323, %s322, 127
        %s325 = smul.addr %s324, 8
        %s326 = scalar_lea.vmem %s0, %s325
        %p327 = pneg %p45
        %p328 = pneg %p42
        %p329 = pneg %p66
        %p330 = pneg %p63
        %p331 = pneg %p87
        %p332 = pneg %p84
        %p333 = pneg %p108
        %p334 = pneg %p105
        %p335 = pneg %p129
        %p336 = pneg %p126
        %p337 = pneg %p150
        %p338 = pneg %p147
        %p339 = pneg %p171
        %p340 = pneg %p168
        %p341 = pneg %p192
        %p342 = pneg %p189
        %p343 = pneg %p213
        %p344 = pneg %p210
        %p345 = pneg %p234
        %p346 = pneg %p231
        %p347 = pneg %p260
        %p348 = pneg %p257
        %s349 = sand.u32 %s247, 1
        %s350 = scalar_lea.sflag [#allocation3], %s349
        %s351 = sand.u32 %s247, 1
        %s352 = smul.addr %s351, 16
        %s353 = scalar_lea.vmem [#allocation2], %s352
        %s354 = smul.u32 16, %s24
        %p355 = scmp.lt.s32.totalorder %s354, 127
        %s356 = scalar_select %p355, %s354, 127
        %s357 = smul.addr %s356, 8
        %s358 = scalar_lea.vmem %s0, %s357
        %s359 = smul.u32 16, %s24
        %s360 = smul.u32 2, %s24
        %v362 = vld [vmem:[%s358] sm:$0xff]
        %v363 = vld [vmem:[%s358 + $0x8] sm:$0xff]
        %v364 = vld [vmem:[%s358 + $0x10] sm:$0xff]
        %v365 = vld [vmem:[%s358 + $0x18] sm:$0xff]
        %v366 = vld [vmem:[%s358 + $0x20] sm:$0xff]
        %v367 = vld [vmem:[%s358 + $0x28] sm:$0xff]
        %v368 = vld [vmem:[%s358 + $0x30] sm:$0xff]
        %v369 = vld [vmem:[%s358 + $0x38] sm:$0xff]
        %v370 = vld [vmem:[%s358 + $0x40] sm:$0xff]
        %v371 = vld [vmem:[%s358 + $0x48] sm:$0xff]
        %v372 = vld [vmem:[%s358 + $0x50] sm:$0xff]
        %v373 = vld [vmem:[%s358 + $0x58] sm:$0xff]
        %v374 = vld [vmem:[%s358 + $0x60] sm:$0xff]
        %v375 = vld [vmem:[%s358 + $0x68] sm:$0xff]
        %v376 = vld [vmem:[%s358 + $0x70] sm:$0xff]
        %v377 = vld [vmem:[%s358 + $0x78] sm:$0xff]
        %v378 = vld [vmem:[%s7] sm:$0xff]
        %v379 = vld [vmem:[%s7 + $0x8] sm:$0xf]
        %v380 = vpack.c.bf16 %v363, %v362
        %v381 = vpack.c.bf16 %v365, %v364
        %v382 = vpack.c.bf16 %v367, %v366
        %v383 = vpack.c.bf16 %v369, %v368
        %v384 = vpack.c.bf16 %v371, %v370
        %v385 = vpack.c.bf16 %v373, %v372
        %v386 = vpack.c.bf16 %v375, %v374
        %v387 = vpack.c.bf16 %v377, %v376
        %v388 = vld [vmem:[%s1] sm:$0xff]
        %v389 = vld [vmem:[%s1 + $0x8] sm:$0xf]
        %v390 = vld [vmem:[%s1 + $0xc] sm:$0xff]
        %v391 = vld [vmem:[%s1 + $0x14] sm:$0xf]
        %v392 = vld [vmem:[%s1 + $0x18] sm:$0xff]
        %v393 = vld [vmem:[%s1 + $0x20] sm:$0xf]
        %v394 = vld [vmem:[%s1 + $0x24] sm:$0xff]
        %v395 = vld [vmem:[%s1 + $0x2c] sm:$0xf]
        %v404 = vunpack.c.l.b16 %v388
        %v405 = vunpack.c.h.b16 %v388
        %v406 = vunpack.c.l.b16 %v389
        %v407 = vunpack.c.l.b16 %v390
        %v408 = vunpack.c.h.b16 %v390
        %v409 = vunpack.c.l.b16 %v391
        %v410 = vunpack.c.l.b16 %v392
        %v411 = vunpack.c.h.b16 %v392
        %v412 = vunpack.c.l.b16 %v393
        %v413 = vunpack.c.l.b16 %v394
        %v414 = vunpack.c.h.b16 %v394
        %v415 = vunpack.c.l.b16 %v395
        %v416 = vpack.c.b16 %v407, %v404
        %v417 = vpack.c.b16 %v408, %v405
        %v418 = vpack.c.b16 %v409, %v406
        %v419 = vpack.c.b16 %v413, %v410
        %v420 = vpack.c.b16 %v414, %v411
        %v421 = vpack.c.b16 %v415, %v412
        %vm428 = vcmask 261120
        %v430 = vsel %vm428, %v380, 0
        %v433 = vsel %vm428, %v381, 0
        %v436 = vsel %vm428, %v382, 0
        %v439 = vsel %vm428, %v383, 0
        %v442 = vsel %vm428, %v384, 0
        %v445 = vsel %vm428, %v385, 0
        %v448 = vsel %vm428, %v386, 0
        %v451 = vsel %vm428, %v387, 0
        %453 = vmatprep.subr.bf16.mxu0 %v417
        %454 = vmatpush1.bf16.msra.mxu0 %v416
        %455 = vmatprep.subr.bf16.mxu0 %v420
        %456 = vmatpush1.bf16.msra.mxu0 %v419
        %457 = vmatprep.subr.bf16.mxu0 0
        %458 = vmatpush1.bf16.msra.mxu0 0
        %459 = vmatprep.subr.bf16.mxu0 0
        %460 = vmatpush1.bf16.msra.mxu0 0
        %461 = vmatprep.subr.bf16.mxu0 0
        %462 = vmatpush1.bf16.msra.mxu0 0
        %463 = vmatprep.subr.bf16.mxu0 0
        %464 = vmatpush1.bf16.msra.mxu0 0
        %465 = vmatprep.subr.bf16.mxu0 0
        %466 = vmatpush1.bf16.msra.mxu0 0
        %467 = vmatprep.subr.bf16.mxu0 0
        %468 = vmatpush1.bf16.msra.mxu0 0
        %469 = vmatprep.subr.bf16.mxu0 0
        %470 = vmatpush1.bf16.msra.mxu0 0
        %471 = vmatprep.subr.bf16.mxu0 0
        %472 = vmatpush1.bf16.msra.mxu0 0
        %473 = vmatprep.subr.bf16.mxu0 0
        %474 = vmatpush1.bf16.msra.mxu0 0
        %475 = vmatprep.subr.bf16.mxu0 0
        %476 = vmatpush1.bf16.msra.mxu0 0
        %477 = vmatprep.subr.bf16.mxu0 0
        %478 = vmatpush1.bf16.msra.mxu0 0
        %479 = vmatprep.subr.bf16.mxu0 0
        %480 = vmatpush1.bf16.msra.mxu0 0
        %481 = vmatprep.subr.bf16.mxu0 0
        %482 = vmatpush1.bf16.msra.mxu0 0
        %483 = vmatprep.subr.bf16.mxu0 0
        %484 = vmatpush1.bf16.msra.mxu0 0
        %485 = vmatprep.mubr.bf16.mxu0 0
        %486 = vmatmul.mubr.bf16.gmra.mrb[0].mxu0 %v430
        %v487 = vpop.f32.mrb[0].mxu0
        %v488 = vadd.f32 0.0, %v487
        %v489 = vpop.f32.mrb[0].mxu0
        %v490 = vadd.f32 0.0, %v489
        %v491 = vpop.f32.mrb[0].mxu0
        %v492 = vadd.f32 0.0, %v491
        %v493 = vpop.f32.mrb[0].mxu0
        %v494 = vadd.f32 0.0, %v493
        %495 = vmatprep.mubr.bf16.mxu0 0
        %496 = vmatmul.mubr.bf16.gmra.mrb[0].mxu0 %v433
        %v497 = vpop.f32.mrb[0].mxu0
        %v498 = vadd.f32 0.0, %v497
        %v499 = vpop.f32.mrb[0].mxu0
        %v500 = vadd.f32 0.0, %v499
        %v501 = vpop.f32.mrb[0].mxu0
        %v502 = vadd.f32 0.0, %v501
        %v503 = vpop.f32.mrb[0].mxu0
        %v504 = vadd.f32 0.0, %v503
        %505 = vmatprep.mubr.bf16.mxu0 0
        %506 = vmatmul.mubr.bf16.gmra.mrb[0].mxu0 %v436
        %v507 = vpop.f32.mrb[0].mxu0
        %v508 = vadd.f32 0.0, %v507
        %v509 = vpop.f32.mrb[0].mxu0
        %v510 = vadd.f32 0.0, %v509
        %v511 = vpop.f32.mrb[0].mxu0
        %v512 = vadd.f32 0.0, %v511
        %v513 = vpop.f32.mrb[0].mxu0
        %v514 = vadd.f32 0.0, %v513
        %515 = vmatprep.mubr.bf16.mxu0 0
        %516 = vmatmul.mubr.bf16.gmra.mrb[0].mxu0 %v439
        %v517 = vpop.f32.mrb[0].mxu0
        %v518 = vadd.f32 0.0, %v517
        %v519 = vpop.f32.mrb[0].mxu0
        %v520 = vadd.f32 0.0, %v519
        %v521 = vpop.f32.mrb[0].mxu0
        %v522 = vadd.f32 0.0, %v521
        %v523 = vpop.f32.mrb[0].mxu0
        %v524 = vadd.f32 0.0, %v523
        %525 = vmatprep.mubr.bf16.mxu0 0
        %526 = vmatmul.mubr.bf16.gmra.mrb[0].mxu0 %v442
        %v527 = vpop.f32.mrb[0].mxu0
        %v528 = vadd.f32 0.0, %v527
        %v529 = vpop.f32.mrb[0].mxu0
        %v530 = vadd.f32 0.0, %v529
        %v531 = vpop.f32.mrb[0].mxu0
        %v532 = vadd.f32 0.0, %v531
        %v533 = vpop.f32.mrb[0].mxu0
        %v534 = vadd.f32 0.0, %v533
        %535 = vmatprep.mubr.bf16.mxu0 0
        %536 = vmatmul.mubr.bf16.gmra.mrb[0].mxu0 %v445
        %v537 = vpop.f32.mrb[0].mxu0
        %v538 = vadd.f32 0.0, %v537
        %v539 = vpop.f32.mrb[0].mxu0
        %v540 = vadd.f32 0.0, %v539
        %v541 = vpop.f32.mrb[0].mxu0
        %v542 = vadd.f32 0.0, %v541
        %v543 = vpop.f32.mrb[0].mxu0
        %v544 = vadd.f32 0.0, %v543
        %545 = vmatprep.mubr.bf16.mxu0 0
        %546 = vmatmul.mubr.bf16.gmra.mrb[0].mxu0 %v448
        %v547 = vpop.f32.mrb[0].mxu0
        %v548 = vadd.f32 0.0, %v547
        %v549 = vpop.f32.mrb[0].mxu0
        %v550 = vadd.f32 0.0, %v549
        %v551 = vpop.f32.mrb[0].mxu0
        %v552 = vadd.f32 0.0, %v551
        %v553 = vpop.f32.mrb[0].mxu0
        %v554 = vadd.f32 0.0, %v553
        %555 = vmatprep.mubr.bf16.mxu0 0
        %556 = vmatmul.mubr.bf16.gmra.mrb[0].mxu0 %v451
        %v557 = vpop.f32.mrb[0].mxu0
        %v558 = vadd.f32 0.0, %v557
        %v559 = vpop.f32.mrb[0].mxu0
        %v560 = vadd.f32 0.0, %v559
        %v561 = vpop.f32.mrb[0].mxu0
        %v562 = vadd.f32 0.0, %v561
        %v563 = vpop.f32.mrb[0].mxu0
        %v564 = vadd.f32 0.0, %v563
        %565 = vdwg.mxu0
        %566 = vmatprep.subr.bf16.mxu0 0
        %567 = vmatpush1.bf16.msra.mxu0 %v418
        %568 = vmatprep.subr.bf16.mxu0 0
        %569 = vmatpush1.bf16.msra.mxu0 %v421
        %570 = vmatprep.subr.bf16.mxu0 0
        %571 = vmatpush1.bf16.msra.mxu0 0
        %572 = vmatprep.subr.bf16.mxu0 0
        %573 = vmatpush1.bf16.msra.mxu0 0
        %574 = vmatprep.subr.bf16.mxu0 0
        %575 = vmatpush1.bf16.msra.mxu0 0
        %576 = vmatprep.subr.bf16.mxu0 0
        %577 = vmatpush1.bf16.msra.mxu0 0
        %578 = vmatprep.subr.bf16.mxu0 0
        %579 = vmatpush1.bf16.msra.mxu0 0
        %580 = vmatprep.subr.bf16.mxu0 0
        %581 = vmatpush1.bf16.msra.mxu0 0
        %582 = vmatprep.subr.bf16.mxu0 0
        %583 = vmatpush1.bf16.msra.mxu0 0
        %584 = vmatprep.subr.bf16.mxu0 0
        %585 = vmatpush1.bf16.msra.mxu0 0
        %586 = vmatprep.subr.bf16.mxu0 0
        %587 = vmatpush1.bf16.msra.mxu0 0
        %588 = vmatprep.subr.bf16.mxu0 0
        %589 = vmatpush1.bf16.msra.mxu0 0
        %590 = vmatprep.subr.bf16.mxu0 0
        %591 = vmatpush1.bf16.msra.mxu0 0
        %592 = vmatprep.subr.bf16.mxu0 0
        %593 = vmatpush1.bf16.msra.mxu0 0
        %594 = vmatprep.subr.bf16.mxu0 0
        %595 = vmatpush1.bf16.msra.mxu0 0
        %596 = vmatprep.subr.bf16.mxu0 0
        %597 = vmatpush1.bf16.msra.mxu0 0
        %598 = vmatprep.mubr.bf16.mxu0 0
        %599 = vmatmul.mubr.bf16.gmra.mrb[0].mxu0 %v430
        %v600 = vpop.f32.mrb[0].mxu0
        %v601 = vadd.f32 0.0, %v600
        %v602 = vpop.f32.mrb[0].mxu0
        %v603 = vpop.f32.mrb[0].mxu0
        %v604 = vadd.f32 0.0, %v603
        %v605 = vpop.f32.mrb[0].mxu0
        %606 = vmatprep.mubr.bf16.mxu0 0
        %607 = vmatmul.mubr.bf16.gmra.mrb[0].mxu0 %v433
        %v608 = vpop.f32.mrb[0].mxu0
        %v609 = vadd.f32 0.0, %v608
        %v610 = vpop.f32.mrb[0].mxu0
        %v611 = vpop.f32.mrb[0].mxu0
        %v612 = vadd.f32 0.0, %v611
        %v613 = vpop.f32.mrb[0].mxu0
        %614 = vmatprep.mubr.bf16.mxu0 0
        %615 = vmatmul.mubr.bf16.gmra.mrb[0].mxu0 %v436
        %v616 = vpop.f32.mrb[0].mxu0
        %v617 = vadd.f32 0.0, %v616
        %v618 = vpop.f32.mrb[0].mxu0
        %v619 = vpop.f32.mrb[0].mxu0
        %v620 = vadd.f32 0.0, %v619
        %v621 = vpop.f32.mrb[0].mxu0
        %622 = vmatprep.mubr.bf16.mxu0 0
        %623 = vmatmul.mubr.bf16.gmra.mrb[0].mxu0 %v439
        %v624 = vpop.f32.mrb[0].mxu0
        %v625 = vadd.f32 0.0, %v624
        %v626 = vpop.f32.mrb[0].mxu0
        %v627 = vpop.f32.mrb[0].mxu0
        %v628 = vadd.f32 0.0, %v627
        %v629 = vpop.f32.mrb[0].mxu0
        %630 = vmatprep.mubr.bf16.mxu0 0
        %631 = vmatmul.mubr.bf16.gmra.mrb[0].mxu0 %v442
        %v632 = vpop.f32.mrb[0].mxu0
        %v633 = vadd.f32 0.0, %v632
        %v634 = vpop.f32.mrb[0].mxu0
        %v635 = vpop.f32.mrb[0].mxu0
        %v636 = vadd.f32 0.0, %v635
        %v637 = vpop.f32.mrb[0].mxu0
        %638 = vmatprep.mubr.bf16.mxu0 0
        %639 = vmatmul.mubr.bf16.gmra.mrb[0].mxu0 %v445
        %v640 = vpop.f32.mrb[0].mxu0
        %v641 = vadd.f32 0.0, %v640
        %v642 = vpop.f32.mrb[0].mxu0
        %v643 = vpop.f32.mrb[0].mxu0
        %v644 = vadd.f32 0.0, %v643
        %v645 = vpop.f32.mrb[0].mxu0
        %646 = vmatprep.mubr.bf16.mxu0 0
        %647 = vmatmul.mubr.bf16.gmra.mrb[0].mxu0 %v448
        %v648 = vpop.f32.mrb[0].mxu0
        %v649 = vadd.f32 0.0, %v648
        %v650 = vpop.f32.mrb[0].mxu0
        %v651 = vpop.f32.mrb[0].mxu0
        %v652 = vadd.f32 0.0, %v651
        %v653 = vpop.f32.mrb[0].mxu0
        %654 = vmatprep.mubr.bf16.mxu0 0
        %655 = vmatmul.mubr.bf16.gmra.mrb[0].mxu0 %v451
        %v656 = vpop.f32.mrb[0].mxu0
        %v657 = vadd.f32 0.0, %v656
        %v658 = vpop.f32.mrb[0].mxu0
        %v659 = vpop.f32.mrb[0].mxu0
        %v660 = vadd.f32 0.0, %v659
        %v661 = vpop.f32.mrb[0].mxu0
        %662 = vdwg.mxu0
        %v663 = vlaneseq
        %v664 = vshrl.u32 %v663, 7
        %v665 = vsub.s32 0, %v664
        %v666 = vrot.slane %v378, %v665
        %v667 = vadd.f32 %v488, %v666
        %v668 = vadd.f32 %v492, %v666
        %v669 = vadd.f32 %v498, %v666
        %v670 = vadd.f32 %v502, %v666
        %v671 = vadd.f32 %v508, %v666
        %v672 = vadd.f32 %v512, %v666
        %v673 = vadd.f32 %v518, %v666
        %v674 = vadd.f32 %v522, %v666
        %v675 = vadd.f32 %v528, %v666
        %v676 = vadd.f32 %v532, %v666
        %v677 = vadd.f32 %v538, %v666
        %v678 = vadd.f32 %v542, %v666
        %v679 = vadd.f32 %v548, %v666
        %v680 = vadd.f32 %v552, %v666
        %v681 = vadd.f32 %v558, %v666
        %v682 = vadd.f32 %v562, %v666
        %v683 = vlaneseq
        %v684 = vshrl.u32 %v683, 7
        %v685 = vsub.s32 1, %v684
        %v686 = vrot.slane %v378, %v685
        %v687 = vadd.f32 %v490, %v686
        %v688 = vadd.f32 %v494, %v686
        %v689 = vadd.f32 %v500, %v686
        %v690 = vadd.f32 %v504, %v686
        %v691 = vadd.f32 %v510, %v686
        %v692 = vadd.f32 %v514, %v686
        %v693 = vadd.f32 %v520, %v686
        %v694 = vadd.f32 %v524, %v686
        %v695 = vadd.f32 %v530, %v686
        %v696 = vadd.f32 %v534, %v686
        %v697 = vadd.f32 %v540, %v686
        %v698 = vadd.f32 %v544, %v686
        %v699 = vadd.f32 %v550, %v686
        %v700 = vadd.f32 %v554, %v686
        %v701 = vadd.f32 %v560, %v686
        %v702 = vadd.f32 %v564, %v686
        %v703 = vlaneseq
        %v704 = vshrl.u32 %v703, 7
        %v705 = vsub.s32 2, %v704
        %v706 = vrot.slane %v378, %v705
        %v707 = vadd.f32 %v601, %v706
        %v708 = vadd.f32 %v604, %v706
        %v709 = vadd.f32 %v609, %v706
        %v710 = vadd.f32 %v612, %v706
        %v711 = vadd.f32 %v617, %v706
        %v712 = vadd.f32 %v620, %v706
        %v713 = vadd.f32 %v625, %v706
        %v714 = vadd.f32 %v628, %v706
        %v715 = vadd.f32 %v633, %v706
        %v716 = vadd.f32 %v636, %v706
        %v717 = vadd.f32 %v641, %v706
        %v718 = vadd.f32 %v644, %v706
        %v719 = vadd.f32 %v649, %v706
        %v720 = vadd.f32 %v652, %v706
        %v721 = vadd.f32 %v657, %v706
        %v722 = vadd.f32 %v660, %v706
        %v723 = vpack.c.bf16 %v668, %v667
        %v724 = vpack.c.bf16 %v670, %v669
        %v725 = vpack.c.bf16 %v672, %v671
        %v726 = vpack.c.bf16 %v674, %v673
        %v727 = vpack.c.bf16 %v676, %v675
        %v728 = vpack.c.bf16 %v678, %v677
        %v729 = vpack.c.bf16 %v680, %v679
        %v730 = vpack.c.bf16 %v682, %v681
        %v731 = vpack.c.bf16 %v688, %v687
        %v732 = vpack.c.bf16 %v690, %v689
        %v733 = vpack.c.bf16 %v692, %v691
        %v734 = vpack.c.bf16 %v694, %v693
        %v735 = vpack.c.bf16 %v696, %v695
        %v736 = vpack.c.bf16 %v698, %v697
        %v737 = vpack.c.bf16 %v700, %v699
        %v738 = vpack.c.bf16 %v702, %v701
        %v739 = vld [vmem:[%s8] sm:$0xff]
        %v740 = vld [vmem:[%s8 + $0x8] sm:$0xff]
        %v741 = vld [vmem:[%s8 + $0x10] sm:$0xff]
        %v742 = vld [vmem:[%s8 + $0x18] sm:$0xff]
        %v743 = vld [vmem:[%s8 + $0x20] sm:$0xff]
        %v744 = vld [vmem:[%s8 + $0x28] sm:$0xff]
        %v745 = vld [vmem:[%s8 + $0x30] sm:$0xff]
        %v746 = vld [vmem:[%s8 + $0x38] sm:$0xff]
        %v747 = vld [vmem:[%s8 + $0x40] sm:$0xff]
        %v748 = vld [vmem:[%s8 + $0x48] sm:$0xff]
        %v749 = vld [vmem:[%s8 + $0x50] sm:$0xff]
        %v750 = vld [vmem:[%s8 + $0x58] sm:$0xff]
        %v751 = vld [vmem:[%s8 + $0x60] sm:$0xff]
        %v752 = vld [vmem:[%s8 + $0x68] sm:$0xff]
        %v753 = vld [vmem:[%s8 + $0x70] sm:$0xff]
        %v754 = vld [vmem:[%s8 + $0x78] sm:$0xff]
        %755 = vmatprep.subr.bf16.mxu0 0
        %756 = vmatpush1.bf16.xpose.msra.mxu0 %v731
        %757 = vmatprep.subr.bf16.mxu0 0
        %758 = vmatpush1.bf16.xpose.msra.mxu0 %v732
        %759 = vmatprep.subr.bf16.mxu0 0
        %760 = vmatpush1.bf16.xpose.msra.mxu0 %v733
        %761 = vmatprep.subr.bf16.mxu0 0
        %762 = vmatpush1.bf16.xpose.msra.mxu0 %v734
        %763 = vmatprep.subr.bf16.mxu0 0
        %764 = vmatpush1.bf16.xpose.msra.mxu0 %v735
        %765 = vmatprep.subr.bf16.mxu0 0
        %766 = vmatpush1.bf16.xpose.msra.mxu0 %v736
        %767 = vmatprep.subr.bf16.mxu0 0
        %768 = vmatpush1.bf16.xpose.msra.mxu0 %v737
        %769 = vmatprep.subr.bf16.mxu0 0
        %770 = vmatpush1.bf16.xpose.msra.mxu0 %v738
        %771 = vmatprep.subr.bf16.mxu0 0
        %772 = vmatpush1.bf16.xpose.msra.mxu0 0
        %773 = vmatprep.subr.bf16.mxu0 0
        %774 = vmatpush1.bf16.xpose.msra.mxu0 0
        %775 = vmatprep.subr.bf16.mxu0 0
        %776 = vmatpush1.bf16.xpose.msra.mxu0 0
        %777 = vmatprep.subr.bf16.mxu0 0
        %778 = vmatpush1.bf16.xpose.msra.mxu0 0
        %779 = vmatprep.subr.bf16.mxu0 0
        %780 = vmatpush1.bf16.xpose.msra.mxu0 0
        %781 = vmatprep.subr.bf16.mxu0 0
        %782 = vmatpush1.bf16.xpose.msra.mxu0 0
        %783 = vmatprep.subr.bf16.mxu0 0
        %784 = vmatpush1.bf16.xpose.msra.mxu0 0
        %785 = vmatprep.subr.bf16.mxu0 0
        %786 = vmatpush1.bf16.xpose.msra.mxu0 0
        %787 = vmatprep.mubr.bf16.mxu0 0
        %788 = vmatmul.mubr.bf16.gmra.mrb[0].mxu0 %v723
        %v789 = vpop.f32.mrb[0].mxu0
        %v790 = vadd.f32 %v739, %v789
        %v791 = vpop.f32.mrb[0].mxu0
        %v792 = vpop.f32.mrb[0].mxu0
        %v793 = vadd.f32 %v740, %v792
        %v794 = vpop.f32.mrb[0].mxu0
        %795 = vmatprep.mubr.bf16.mxu0 0
        %796 = vmatmul.mubr.bf16.gmra.mrb[0].mxu0 %v724
        %v797 = vpop.f32.mrb[0].mxu0
        %v798 = vadd.f32 %v741, %v797
        %v799 = vpop.f32.mrb[0].mxu0
        %v800 = vpop.f32.mrb[0].mxu0
        %v801 = vadd.f32 %v742, %v800
        %v802 = vpop.f32.mrb[0].mxu0
        %803 = vmatprep.mubr.bf16.mxu0 0
        %804 = vmatmul.mubr.bf16.gmra.mrb[0].mxu0 %v725
        %v805 = vpop.f32.mrb[0].mxu0
        %v806 = vadd.f32 %v743, %v805
        %v807 = vpop.f32.mrb[0].mxu0
        %v808 = vpop.f32.mrb[0].mxu0
        %v809 = vadd.f32 %v744, %v808
        %v810 = vpop.f32.mrb[0].mxu0
        %811 = vmatprep.mubr.bf16.mxu0 0
        %812 = vmatmul.mubr.bf16.gmra.mrb[0].mxu0 %v726
        %v813 = vpop.f32.mrb[0].mxu0
        %v814 = vadd.f32 %v745, %v813
        %v815 = vpop.f32.mrb[0].mxu0
        %v816 = vpop.f32.mrb[0].mxu0
        %v817 = vadd.f32 %v746, %v816
        %v818 = vpop.f32.mrb[0].mxu0
        %819 = vmatprep.mubr.bf16.mxu0 0
        %820 = vmatmul.mubr.bf16.gmra.mrb[0].mxu0 %v727
        %v821 = vpop.f32.mrb[0].mxu0
        %v822 = vadd.f32 %v747, %v821
        %v823 = vpop.f32.mrb[0].mxu0
        %v824 = vpop.f32.mrb[0].mxu0
        %v825 = vadd.f32 %v748, %v824
        %v826 = vpop.f32.mrb[0].mxu0
        %827 = vmatprep.mubr.bf16.mxu0 0
        %828 = vmatmul.mubr.bf16.gmra.mrb[0].mxu0 %v728
        %v829 = vpop.f32.mrb[0].mxu0
        %v830 = vadd.f32 %v749, %v829
        %v831 = vpop.f32.mrb[0].mxu0
        %v832 = vpop.f32.mrb[0].mxu0
        %v833 = vadd.f32 %v750, %v832
        %v834 = vpop.f32.mrb[0].mxu0
        %835 = vmatprep.mubr.bf16.mxu0 0
        %836 = vmatmul.mubr.bf16.gmra.mrb[0].mxu0 %v729
        %v837 = vpop.f32.mrb[0].mxu0
        %v838 = vadd.f32 %v751, %v837
        %v839 = vpop.f32.mrb[0].mxu0
        %v840 = vpop.f32.mrb[0].mxu0
        %v841 = vadd.f32 %v752, %v840
        %v842 = vpop.f32.mrb[0].mxu0
        %843 = vmatprep.mubr.bf16.mxu0 0
        %844 = vmatmul.mubr.bf16.gmra.mrb[0].mxu0 %v730
        %v845 = vpop.f32.mrb[0].mxu0
        %v846 = vadd.f32 %v753, %v845
        %v847 = vpop.f32.mrb[0].mxu0
        %v848 = vpop.f32.mrb[0].mxu0
        %v849 = vadd.f32 %v754, %v848
        %v850 = vpop.f32.mrb[0].mxu0
        %851 = vdwg.mxu0
        %852 = vmax.xlane.f32.xlu0 %v790
        %v853 = vpop.xlane.xlu0 %852
        %854 = vmax.xlane.f32.xlu0 %v793
        %v855 = vpop.xlane.xlu0 %854
        %856 = vmax.xlane.f32.xlu0 %v798
        %v857 = vpop.xlane.xlu0 %856
        %858 = vmax.xlane.f32.xlu0 %v801
        %v859 = vpop.xlane.xlu0 %858
        %860 = vmax.xlane.f32.xlu0 %v806
        %v861 = vpop.xlane.xlu0 %860
        %862 = vmax.xlane.f32.xlu0 %v809
        %v863 = vpop.xlane.xlu0 %862
        %864 = vmax.xlane.f32.xlu0 %v814
        %v865 = vpop.xlane.xlu0 %864
        %866 = vmax.xlane.f32.xlu0 %v817
        %v867 = vpop.xlane.xlu0 %866
        %868 = vmax.xlane.f32.xlu0 %v822
        %v869 = vpop.xlane.xlu0 %868
        %870 = vmax.xlane.f32.xlu0 %v825
        %v871 = vpop.xlane.xlu0 %870
        %872 = vmax.xlane.f32.xlu0 %v830
        %v873 = vpop.xlane.xlu0 %872
        %874 = vmax.xlane.f32.xlu0 %v833
        %v875 = vpop.xlane.xlu0 %874
        %876 = vmax.xlane.f32.xlu0 %v838
        %v877 = vpop.xlane.xlu0 %876
        %878 = vmax.xlane.f32.xlu0 %v841
        %v879 = vpop.xlane.xlu0 %878
        %880 = vmax.xlane.f32.xlu0 %v846
        %v881 = vpop.xlane.xlu0 %880
        %882 = vmax.xlane.f32.xlu0 %v849
        %v883 = vpop.xlane.xlu0 %882
        %v884 = vsub.f32 %v790, %v853
        %v885 = vsub.f32 %v793, %v855
        %v886 = vsub.f32 %v798, %v857
        %v887 = vsub.f32 %v801, %v859
        %v888 = vsub.f32 %v806, %v861
        %v889 = vsub.f32 %v809, %v863
        %v890 = vsub.f32 %v814, %v865
        %v891 = vsub.f32 %v817, %v867
        %v892 = vsub.f32 %v822, %v869
        %v893 = vsub.f32 %v825, %v871
        %v894 = vsub.f32 %v830, %v873
        %v895 = vsub.f32 %v833, %v875
        %v896 = vsub.f32 %v838, %v877
        %v897 = vsub.f32 %v841, %v879
        %v898 = vsub.f32 %v846, %v881
        %v899 = vsub.f32 %v849, %v883
        %v900 = vmul.f32 %v884, 1.442695
        %v901 = vpow.pop %v900
        %v902 = vmul.f32 %v885, 1.442695
        %v903 = vpow.pop %v902
        %v904 = vmul.f32 %v886, 1.442695
        %v905 = vpow.pop %v904
        %v906 = vmul.f32 %v887, 1.442695
        %v907 = vpow.pop %v906
        %v908 = vmul.f32 %v888, 1.442695
        %v909 = vpow.pop %v908
        %v910 = vmul.f32 %v889, 1.442695
        %v911 = vpow.pop %v910
        %v912 = vmul.f32 %v890, 1.442695
        %v913 = vpow.pop %v912
        %v914 = vmul.f32 %v891, 1.442695
        %v915 = vpow.pop %v914
        %v916 = vmul.f32 %v892, 1.442695
        %v917 = vpow.pop %v916
        %v918 = vmul.f32 %v893, 1.442695
        %v919 = vpow.pop %v918
        %v920 = vmul.f32 %v894, 1.442695
        %v921 = vpow.pop %v920
        %v922 = vmul.f32 %v895, 1.442695
        %v923 = vpow.pop %v922
        %v924 = vmul.f32 %v896, 1.442695
        %v925 = vpow.pop %v924
        %v926 = vmul.f32 %v897, 1.442695
        %v927 = vpow.pop %v926
        %v928 = vmul.f32 %v898, 1.442695
        %v929 = vpow.pop %v928
        %v930 = vmul.f32 %v899, 1.442695
        %v931 = vpow.pop %v930
        %932 = vadd.xlane.f32.xlu0 %v901
        %v933 = vpop.xlane.xlu0 %932
        %934 = vadd.xlane.f32.xlu0 %v903
        %v935 = vpop.xlane.xlu0 %934
        %936 = vadd.xlane.f32.xlu0 %v905
        %v937 = vpop.xlane.xlu0 %936
        %938 = vadd.xlane.f32.xlu0 %v907
        %v939 = vpop.xlane.xlu0 %938
        %940 = vadd.xlane.f32.xlu0 %v909
        %v941 = vpop.xlane.xlu0 %940
        %942 = vadd.xlane.f32.xlu0 %v911
        %v943 = vpop.xlane.xlu0 %942
        %944 = vadd.xlane.f32.xlu0 %v913
        %v945 = vpop.xlane.xlu0 %944
        %946 = vadd.xlane.f32.xlu0 %v915
        %v947 = vpop.xlane.xlu0 %946
        %948 = vadd.xlane.f32.xlu0 %v917
        %v949 = vpop.xlane.xlu0 %948
        %950 = vadd.xlane.f32.xlu0 %v919
        %v951 = vpop.xlane.xlu0 %950
        %952 = vadd.xlane.f32.xlu0 %v921
        %v953 = vpop.xlane.xlu0 %952
        %954 = vadd.xlane.f32.xlu0 %v923
        %v955 = vpop.xlane.xlu0 %954
        %956 = vadd.xlane.f32.xlu0 %v925
        %v957 = vpop.xlane.xlu0 %956
        %958 = vadd.xlane.f32.xlu0 %v927
        %v959 = vpop.xlane.xlu0 %958
        %960 = vadd.xlane.f32.xlu0 %v929
        %v961 = vpop.xlane.xlu0 %960
        %962 = vadd.xlane.f32.xlu0 %v931
        %v963 = vpop.xlane.xlu0 %962
        %v964 = vrcp.pop %v933
        %v965 = vrcp.pop %v935
        %v966 = vrcp.pop %v937
        %v967 = vrcp.pop %v939
        %v968 = vrcp.pop %v941
        %v969 = vrcp.pop %v943
        %v970 = vrcp.pop %v945
        %v971 = vrcp.pop %v947
        %v972 = vrcp.pop %v949
        %v973 = vrcp.pop %v951
        %v974 = vrcp.pop %v953
        %v975 = vrcp.pop %v955
        %v976 = vrcp.pop %v957
        %v977 = vrcp.pop %v959
        %v978 = vrcp.pop %v961
        %v979 = vrcp.pop %v963
        %v980 = vmul.f32 %v901, %v964
        %v981 = vmul.f32 %v903, %v965
        %v982 = vmul.f32 %v905, %v966
        %v983 = vmul.f32 %v907, %v967
        %v984 = vmul.f32 %v909, %v968
        %v985 = vmul.f32 %v911, %v969
        %v986 = vmul.f32 %v913, %v970
        %v987 = vmul.f32 %v915, %v971
        %v988 = vmul.f32 %v917, %v972
        %v989 = vmul.f32 %v919, %v973
        %v990 = vmul.f32 %v921, %v974
        %v991 = vmul.f32 %v923, %v975
        %v992 = vmul.f32 %v925, %v976
        %v993 = vmul.f32 %v927, %v977
        %v994 = vmul.f32 %v929, %v978
        %v995 = vmul.f32 %v931, %v979
        %v996 = vpack.c.bf16 %v981, %v980
        %v997 = vpack.c.bf16 %v983, %v982
        %v998 = vpack.c.bf16 %v985, %v984
        %v999 = vpack.c.bf16 %v987, %v986
        %v1000 = vpack.c.bf16 %v989, %v988
        %v1001 = vpack.c.bf16 %v991, %v990
        %v1002 = vpack.c.bf16 %v993, %v992
        %v1003 = vpack.c.bf16 %v995, %v994
        %v1004 = vpack.c.bf16 %v708, %v707
        %v1005 = vpack.c.bf16 %v710, %v709
        %v1006 = vpack.c.bf16 %v712, %v711
        %v1007 = vpack.c.bf16 %v714, %v713
        %v1008 = vpack.c.bf16 %v716, %v715
        %v1009 = vpack.c.bf16 %v718, %v717
        %v1010 = vpack.c.bf16 %v720, %v719
        %v1011 = vpack.c.bf16 %v722, %v721
        %1012 = vmatprep.subr.bf16.mxu0 0
        %1013 = vmatpush1.bf16.msra.mxu0 %v1004
        %1014 = vmatprep.subr.bf16.mxu0 0
        %1015 = vmatpush1.bf16.msra.mxu0 %v1005
        %1016 = vmatprep.subr.bf16.mxu0 0
        %1017 = vmatpush1.bf16.msra.mxu0 %v1006
        %1018 = vmatprep.subr.bf16.mxu0 0
        %1019 = vmatpush1.bf16.msra.mxu0 %v1007
        %1020 = vmatprep.subr.bf16.mxu0 0
        %1021 = vmatpush1.bf16.msra.mxu0 %v1008
        %1022 = vmatprep.subr.bf16.mxu0 0
        %1023 = vmatpush1.bf16.msra.mxu0 %v1009
        %1024 = vmatprep.subr.bf16.mxu0 0
        %1025 = vmatpush1.bf16.msra.mxu0 %v1010
        %1026 = vmatprep.subr.bf16.mxu0 0
        %1027 = vmatpush1.bf16.msra.mxu0 %v1011
        %1028 = vmatprep.subr.bf16.mxu0 0
        %1029 = vmatpush1.bf16.msra.mxu0 0
        %1030 = vmatprep.subr.bf16.mxu0 0
        %1031 = vmatpush1.bf16.msra.mxu0 0
        %1032 = vmatprep.subr.bf16.mxu0 0
        %1033 = vmatpush1.bf16.msra.mxu0 0
        %1034 = vmatprep.subr.bf16.mxu0 0
        %1035 = vmatpush1.bf16.msra.mxu0 0
        %1036 = vmatprep.subr.bf16.mxu0 0
        %1037 = vmatpush1.bf16.msra.mxu0 0
        %1038 = vmatprep.subr.bf16.mxu0 0
        %1039 = vmatpush1.bf16.msra.mxu0 0
        %1040 = vmatprep.subr.bf16.mxu0 0
        %1041 = vmatpush1.bf16.msra.mxu0 0
        %1042 = vmatprep.subr.bf16.mxu0 0
        %1043 = vmatpush1.bf16.msra.mxu0 0
        %1044 = vmatprep.mubr.bf16.mxu0 0
        %1045 = vmatmul.mubr.bf16.gmra.mrb[0].mxu0 %v996
        %v1046 = vpop.f32.mrb[0].mxu0
        %v1047 = vadd.f32 0.0, %v1046
        %v1048 = vpop.f32.mrb[0].mxu0
        %v1049 = vpop.f32.mrb[0].mxu0
        %v1050 = vadd.f32 0.0, %v1049
        %v1051 = vpop.f32.mrb[0].mxu0
        %1052 = vmatprep.mubr.bf16.mxu0 0
        %1053 = vmatmul.mubr.bf16.gmra.mrb[0].mxu0 %v997
        %v1054 = vpop.f32.mrb[0].mxu0
        %v1055 = vadd.f32 0.0, %v1054
        %v1056 = vpop.f32.mrb[0].mxu0
        %v1057 = vpop.f32.mrb[0].mxu0
        %v1058 = vadd.f32 0.0, %v1057
        %v1059 = vpop.f32.mrb[0].mxu0
        %1060 = vmatprep.mubr.bf16.mxu0 0
        %1061 = vmatmul.mubr.bf16.gmra.mrb[0].mxu0 %v998
        %v1062 = vpop.f32.mrb[0].mxu0
        %v1063 = vadd.f32 0.0, %v1062
        %v1064 = vpop.f32.mrb[0].mxu0
        %v1065 = vpop.f32.mrb[0].mxu0
        %v1066 = vadd.f32 0.0, %v1065
        %v1067 = vpop.f32.mrb[0].mxu0
        %1068 = vmatprep.mubr.bf16.mxu0 0
        %1069 = vmatmul.mubr.bf16.gmra.mrb[0].mxu0 %v999
        %v1070 = vpop.f32.mrb[0].mxu0
        %v1071 = vadd.f32 0.0, %v1070
        %v1072 = vpop.f32.mrb[0].mxu0
        %v1073 = vpop.f32.mrb[0].mxu0
        %v1074 = vadd.f32 0.0, %v1073
        %v1075 = vpop.f32.mrb[0].mxu0
        %1076 = vmatprep.mubr.bf16.mxu0 0
        %1077 = vmatmul.mubr.bf16.gmra.mrb[0].mxu0 %v1000
        %v1078 = vpop.f32.mrb[0].mxu0
        %v1079 = vadd.f32 0.0, %v1078
        %v1080 = vpop.f32.mrb[0].mxu0
        %v1081 = vpop.f32.mrb[0].mxu0
        %v1082 = vadd.f32 0.0, %v1081
        %v1083 = vpop.f32.mrb[0].mxu0
        %1084 = vmatprep.mubr.bf16.mxu0 0
        %1085 = vmatmul.mubr.bf16.gmra.mrb[0].mxu0 %v1001
        %v1086 = vpop.f32.mrb[0].mxu0
        %v1087 = vadd.f32 0.0, %v1086
        %v1088 = vpop.f32.mrb[0].mxu0
        %v1089 = vpop.f32.mrb[0].mxu0
        %v1090 = vadd.f32 0.0, %v1089
        %v1091 = vpop.f32.mrb[0].mxu0
        %1092 = vmatprep.mubr.bf16.mxu0 0
        %1093 = vmatmul.mubr.bf16.gmra.mrb[0].mxu0 %v1002
        %v1094 = vpop.f32.mrb[0].mxu0
        %v1095 = vadd.f32 0.0, %v1094
        %v1096 = vpop.f32.mrb[0].mxu0
        %v1097 = vpop.f32.mrb[0].mxu0
        %v1098 = vadd.f32 0.0, %v1097
        %v1099 = vpop.f32.mrb[0].mxu0
        %1100 = vmatprep.mubr.bf16.mxu0 0
        %1101 = vmatmul.mubr.bf16.gmra.mrb[0].mxu0 %v1003
        %v1102 = vpop.f32.mrb[0].mxu0
        %v1103 = vadd.f32 0.0, %v1102
        %v1104 = vpop.f32.mrb[0].mxu0
        %v1105 = vpop.f32.mrb[0].mxu0
        %v1106 = vadd.f32 0.0, %v1105
        %v1107 = vpop.f32.mrb[0].mxu0
        %1108 = vdwg.mxu0
        %v1109 = vpack.c.bf16 %v1050, %v1047
        %v1110 = vpack.c.bf16 %v1058, %v1055
        %v1111 = vpack.c.bf16 %v1066, %v1063
        %v1112 = vpack.c.bf16 %v1074, %v1071
        %v1113 = vpack.c.bf16 %v1082, %v1079
        %v1114 = vpack.c.bf16 %v1090, %v1087
        %v1115 = vpack.c.bf16 %v1098, %v1095
        %v1116 = vpack.c.bf16 %v1106, %v1103
        %v1117 = vld [vmem:[%s2] sm:$0xf]
        %v1118 = vld [vmem:[%s2 + $0x4] sm:$0xf]
        %v1119 = vld [vmem:[%s2 + $0x8] sm:$0xf]
        %v1120 = vld [vmem:[%s2 + $0xc] sm:$0xf]
        %v1121 = vld [vmem:[%s2 + $0x10] sm:$0xf]
        %v1122 = vld [vmem:[%s2 + $0x14] sm:$0xf]
        %v1123 = vld [vmem:[%s2 + $0x18] sm:$0xf]
        %v1124 = vld [vmem:[%s2 + $0x1c] sm:$0xf]
        %v1125 = vld [vmem:[%s2 + $0x20] sm:$0xf]
        %v1126 = vld [vmem:[%s2 + $0x24] sm:$0xf]
        %v1127 = vld [vmem:[%s2 + $0x28] sm:$0xf]
        %v1128 = vld [vmem:[%s2 + $0x2c] sm:$0xf]
        %v1129 = vld [vmem:[%s2 + $0x30] sm:$0xf]
        %v1130 = vld [vmem:[%s2 + $0x34] sm:$0xf]
        %v1131 = vld [vmem:[%s2 + $0x38] sm:$0xf]
        %v1132 = vld [vmem:[%s2 + $0x3c] sm:$0xf]
        %v1133 = vlaneseq
        %v1134 = vshrl.u32 %v1133, 7
        %v1135 = vsub.s32 3, %v1134
        %v1136 = vrot.slane %v378, %v1135
        %v1153 = vunpack.c.l.b16 %v1117
        %v1154 = vunpack.c.l.b16 %v1118
        %v1155 = vunpack.c.l.b16 %v1119
        %v1156 = vunpack.c.l.b16 %v1120
        %v1157 = vunpack.c.l.b16 %v1121
        %v1158 = vunpack.c.l.b16 %v1122
        %v1159 = vunpack.c.l.b16 %v1123
        %v1160 = vunpack.c.l.b16 %v1124
        %v1161 = vunpack.c.l.b16 %v1125
        %v1162 = vunpack.c.l.b16 %v1126
        %v1163 = vunpack.c.l.b16 %v1127
        %v1164 = vunpack.c.l.b16 %v1128
        %v1165 = vunpack.c.l.b16 %v1129
        %v1166 = vunpack.c.l.b16 %v1130
        %v1167 = vunpack.c.l.b16 %v1131
        %v1168 = vunpack.c.l.b16 %v1132
        %v1169 = vpack.c.b16 %v1154, %v1153
        %v1170 = vpack.c.b16 %v1156, %v1155
        %v1171 = vpack.c.b16 %v1158, %v1157
        %v1172 = vpack.c.b16 %v1160, %v1159
        %v1173 = vpack.c.b16 %v1162, %v1161
        %v1174 = vpack.c.b16 %v1164, %v1163
        %v1175 = vpack.c.b16 %v1166, %v1165
        %v1176 = vpack.c.b16 %v1168, %v1167
        %1185 = vmatprep.subr.bf16.mxu0 0
        %1186 = vmatpush1.bf16.msra.mxu0 %v1169
        %1187 = vmatprep.subr.bf16.mxu0 0
        %1188 = vmatpush1.bf16.msra.mxu0 %v1170
        %1189 = vmatprep.subr.bf16.mxu0 0
        %1190 = vmatpush1.bf16.msra.mxu0 %v1171
        %1191 = vmatprep.subr.bf16.mxu0 0
        %1192 = vmatpush1.bf16.msra.mxu0 %v1172
        %1193 = vmatprep.subr.bf16.mxu0 0
        %1194 = vmatpush1.bf16.msra.mxu0 %v1173
        %1195 = vmatprep.subr.bf16.mxu0 0
        %1196 = vmatpush1.bf16.msra.mxu0 %v1174
        %1197 = vmatprep.subr.bf16.mxu0 0
        %1198 = vmatpush1.bf16.msra.mxu0 %v1175
        %1199 = vmatprep.subr.bf16.mxu0 0
        %1200 = vmatpush1.bf16.msra.mxu0 %v1176
        %1201 = vmatprep.subr.bf16.mxu0 0
        %1202 = vmatpush1.bf16.msra.mxu0 0
        %1203 = vmatprep.subr.bf16.mxu0 0
        %1204 = vmatpush1.bf16.msra.mxu0 0
        %1205 = vmatprep.subr.bf16.mxu0 0
        %1206 = vmatpush1.bf16.msra.mxu0 0
        %1207 = vmatprep.subr.bf16.mxu0 0
        %1208 = vmatpush1.bf16.msra.mxu0 0
        %1209 = vmatprep.subr.bf16.mxu0 0
        %1210 = vmatpush1.bf16.msra.mxu0 0
        %1211 = vmatprep.subr.bf16.mxu0 0
        %1212 = vmatpush1.bf16.msra.mxu0 0
        %1213 = vmatprep.subr.bf16.mxu0 0
        %1214 = vmatpush1.bf16.msra.mxu0 0
        %1215 = vmatprep.subr.bf16.mxu0 0
        %1216 = vmatpush1.bf16.msra.mxu0 0
        %1217 = vmatprep.mubr.bf16.mxu0 0
        %1218 = vmatmul.mubr.bf16.gmra.mrb[0].mxu0 %v1109
        %v1219 = vpop.f32.mrb[0].mxu0
        %v1220 = vadd.f32 %v1136, %v1219
        %v1221 = vpop.f32.mrb[0].mxu0
        %v1222 = vpop.f32.mrb[0].mxu0
        %v1223 = vadd.f32 %v1136, %v1222
        %v1224 = vpop.f32.mrb[0].mxu0
        %1225 = vmatprep.mubr.bf16.mxu0 0
        %1226 = vmatmul.mubr.bf16.gmra.mrb[0].mxu0 %v1110
        %v1227 = vpop.f32.mrb[0].mxu0
        %v1228 = vadd.f32 %v1136, %v1227
        %v1229 = vpop.f32.mrb[0].mxu0
        %v1230 = vpop.f32.mrb[0].mxu0
        %v1231 = vadd.f32 %v1136, %v1230
        %v1232 = vpop.f32.mrb[0].mxu0
        %1233 = vmatprep.mubr.bf16.mxu0 0
        %1234 = vmatmul.mubr.bf16.gmra.mrb[0].mxu0 %v1111
        %v1235 = vpop.f32.mrb[0].mxu0
        %v1236 = vadd.f32 %v1136, %v1235
        %v1237 = vpop.f32.mrb[0].mxu0
        %v1238 = vpop.f32.mrb[0].mxu0
        %v1239 = vadd.f32 %v1136, %v1238
        %v1240 = vpop.f32.mrb[0].mxu0
        %1241 = vmatprep.mubr.bf16.mxu0 0
        %1242 = vmatmul.mubr.bf16.gmra.mrb[0].mxu0 %v1112
        %v1243 = vpop.f32.mrb[0].mxu0
        %v1244 = vadd.f32 %v1136, %v1243
        %v1245 = vpop.f32.mrb[0].mxu0
        %v1246 = vpop.f32.mrb[0].mxu0
        %v1247 = vadd.f32 %v1136, %v1246
        %v1248 = vpop.f32.mrb[0].mxu0
        %1249 = vmatprep.mubr.bf16.mxu0 0
        %1250 = vmatmul.mubr.bf16.gmra.mrb[0].mxu0 %v1113
        %v1251 = vpop.f32.mrb[0].mxu0
        %v1252 = vadd.f32 %v1136, %v1251
        %v1253 = vpop.f32.mrb[0].mxu0
        %v1254 = vpop.f32.mrb[0].mxu0
        %v1255 = vadd.f32 %v1136, %v1254
        %v1256 = vpop.f32.mrb[0].mxu0
        %1257 = vmatprep.mubr.bf16.mxu0 0
        %1258 = vmatmul.mubr.bf16.gmra.mrb[0].mxu0 %v1114
        %v1259 = vpop.f32.mrb[0].mxu0
        %v1260 = vadd.f32 %v1136, %v1259
        %v1261 = vpop.f32.mrb[0].mxu0
        %v1262 = vpop.f32.mrb[0].mxu0
        %v1263 = vadd.f32 %v1136, %v1262
        %v1264 = vpop.f32.mrb[0].mxu0
        %1265 = vmatprep.mubr.bf16.mxu0 0
        %1266 = vmatmul.mubr.bf16.gmra.mrb[0].mxu0 %v1115
        %v1267 = vpop.f32.mrb[0].mxu0
        %v1268 = vadd.f32 %v1136, %v1267
        %v1269 = vpop.f32.mrb[0].mxu0
        %v1270 = vpop.f32.mrb[0].mxu0
        %v1271 = vadd.f32 %v1136, %v1270
        %v1272 = vpop.f32.mrb[0].mxu0
        %1273 = vmatprep.mubr.bf16.mxu0 0
        %1274 = vmatmul.mubr.bf16.gmra.mrb[0].mxu0 %v1116
        %v1275 = vpop.f32.mrb[0].mxu0
        %v1276 = vadd.f32 %v1136, %v1275
        %v1277 = vpop.f32.mrb[0].mxu0
        %v1278 = vpop.f32.mrb[0].mxu0
        %v1279 = vadd.f32 %v1136, %v1278
        %v1280 = vpop.f32.mrb[0].mxu0
        %1281 = vdwg.mxu0
        %v1282 = vadd.f32 %v362, %v1220
        %v1283 = vadd.f32 %v363, %v1223
        %v1284 = vadd.f32 %v364, %v1228
        %v1285 = vadd.f32 %v365, %v1231
        %v1286 = vadd.f32 %v366, %v1236
        %v1287 = vadd.f32 %v367, %v1239
        %v1288 = vadd.f32 %v368, %v1244
        %v1289 = vadd.f32 %v369, %v1247
        %v1290 = vadd.f32 %v370, %v1252
        %v1291 = vadd.f32 %v371, %v1255
        %v1292 = vadd.f32 %v372, %v1260
        %v1293 = vadd.f32 %v373, %v1263
        %v1294 = vadd.f32 %v374, %v1268
        %v1295 = vadd.f32 %v375, %v1271
        %v1296 = vadd.f32 %v376, %v1276
        %v1297 = vadd.f32 %v377, %v1279
        %v1298 = vsel %vm428, %v1282, 0.0
        %1299 = vadd.xlane.f32.xlu0 %v1298
        %v1300 = vpop.xlane.xlu0 %1299
        %v1301 = vsel %vm428, %v1283, 0.0
        %1302 = vadd.xlane.f32.xlu0 %v1301
        %v1303 = vpop.xlane.xlu0 %1302
        %v1304 = vsel %vm428, %v1284, 0.0
        %1305 = vadd.xlane.f32.xlu0 %v1304
        %v1306 = vpop.xlane.xlu0 %1305
        %v1307 = vsel %vm428, %v1285, 0.0
        %1308 = vadd.xlane.f32.xlu0 %v1307
        %v1309 = vpop.xlane.xlu0 %1308
        %v1310 = vsel %vm428, %v1286, 0.0
        %1311 = vadd.xlane.f32.xlu0 %v1310
        %v1312 = vpop.xlane.xlu0 %1311
        %v1313 = vsel %vm428, %v1287, 0.0
        %1314 = vadd.xlane.f32.xlu0 %v1313
        %v1315 = vpop.xlane.xlu0 %1314
        %v1316 = vsel %vm428, %v1288, 0.0
        %1317 = vadd.xlane.f32.xlu0 %v1316
        %v1318 = vpop.xlane.xlu0 %1317
        %v1319 = vsel %vm428, %v1289, 0.0
        %1320 = vadd.xlane.f32.xlu0 %v1319
        %v1321 = vpop.xlane.xlu0 %1320
        %v1322 = vsel %vm428, %v1290, 0.0
        %1323 = vadd.xlane.f32.xlu0 %v1322
        %v1324 = vpop.xlane.xlu0 %1323
        %v1325 = vsel %vm428, %v1291, 0.0
        %1326 = vadd.xlane.f32.xlu0 %v1325
        %v1327 = vpop.xlane.xlu0 %1326
        %v1328 = vsel %vm428, %v1292, 0.0
        %1329 = vadd.xlane.f32.xlu0 %v1328
        %v1330 = vpop.xlane.xlu0 %1329
        %v1331 = vsel %vm428, %v1293, 0.0
        %1332 = vadd.xlane.f32.xlu0 %v1331
        %v1333 = vpop.xlane.xlu0 %1332
        %v1334 = vsel %vm428, %v1294, 0.0
        %1335 = vadd.xlane.f32.xlu0 %v1334
        %v1336 = vpop.xlane.xlu0 %1335
        %v1337 = vsel %vm428, %v1295, 0.0
        %1338 = vadd.xlane.f32.xlu0 %v1337
        %v1339 = vpop.xlane.xlu0 %1338
        %v1340 = vsel %vm428, %v1296, 0.0
        %1341 = vadd.xlane.f32.xlu0 %v1340
        %v1342 = vpop.xlane.xlu0 %1341
        %v1343 = vsel %vm428, %v1297, 0.0
        %1344 = vadd.xlane.f32.xlu0 %v1343
        %v1345 = vpop.xlane.xlu0 %1344
        %v1346 = vrcp.pop 32.0
        %v1347 = vmul.f32 %v1300, %v1346
        %v1348 = vmul.f32 %v1303, %v1346
        %v1349 = vmul.f32 %v1306, %v1346
        %v1350 = vmul.f32 %v1309, %v1346
        %v1351 = vmul.f32 %v1312, %v1346
        %v1352 = vmul.f32 %v1315, %v1346
        %v1353 = vmul.f32 %v1318, %v1346
        %v1354 = vmul.f32 %v1321, %v1346
        %v1355 = vmul.f32 %v1324, %v1346
        %v1356 = vmul.f32 %v1327, %v1346
        %v1357 = vmul.f32 %v1330, %v1346
        %v1358 = vmul.f32 %v1333, %v1346
        %v1359 = vmul.f32 %v1336, %v1346
        %v1360 = vmul.f32 %v1339, %v1346
        %v1361 = vmul.f32 %v1342, %v1346
        %v1362 = vmul.f32 %v1345, %v1346
        %v1363 = vsub.f32 %v1282, %v1347
        %v1364 = vsub.f32 %v1283, %v1348
        %v1365 = vsub.f32 %v1284, %v1349
        %v1366 = vsub.f32 %v1285, %v1350
        %v1367 = vsub.f32 %v1286, %v1351
        %v1368 = vsub.f32 %v1287, %v1352
        %v1369 = vsub.f32 %v1288, %v1353
        %v1370 = vsub.f32 %v1289, %v1354
        %v1371 = vsub.f32 %v1290, %v1355
        %v1372 = vsub.f32 %v1291, %v1356
        %v1373 = vsub.f32 %v1292, %v1357
        %v1374 = vsub.f32 %v1293, %v1358
        %v1375 = vsub.f32 %v1294, %v1359
        %v1376 = vsub.f32 %v1295, %v1360
        %v1377 = vsub.f32 %v1296, %v1361
        %v1378 = vsub.f32 %v1297, %v1362
        %v1379 = vmul.f32 %v1363, %v1363
        %v1380 = vmul.f32 %v1364, %v1364
        %v1381 = vmul.f32 %v1365, %v1365
        %v1382 = vmul.f32 %v1366, %v1366
        %v1383 = vmul.f32 %v1367, %v1367
        %v1384 = vmul.f32 %v1368, %v1368
        %v1385 = vmul.f32 %v1369, %v1369
        %v1386 = vmul.f32 %v1370, %v1370
        %v1387 = vmul.f32 %v1371, %v1371
        %v1388 = vmul.f32 %v1372, %v1372
        %v1389 = vmul.f32 %v1373, %v1373
        %v1390 = vmul.f32 %v1374, %v1374
        %v1391 = vmul.f32 %v1375, %v1375
        %v1392 = vmul.f32 %v1376, %v1376
        %v1393 = vmul.f32 %v1377, %v1377
        %v1394 = vmul.f32 %v1378, %v1378
        %v1395 = vsel %vm428, %v1379, 0.0
        %1396 = vadd.xlane.f32.xlu0 %v1395
        %v1397 = vpop.xlane.xlu0 %1396
        %v1398 = vsel %vm428, %v1380, 0.0
        %1399 = vadd.xlane.f32.xlu0 %v1398
        %v1400 = vpop.xlane.xlu0 %1399
        %v1401 = vsel %vm428, %v1381, 0.0
        %1402 = vadd.xlane.f32.xlu0 %v1401
        %v1403 = vpop.xlane.xlu0 %1402
        %v1404 = vsel %vm428, %v1382, 0.0
        %1405 = vadd.xlane.f32.xlu0 %v1404
        %v1406 = vpop.xlane.xlu0 %1405
        %v1407 = vsel %vm428, %v1383, 0.0
        %1408 = vadd.xlane.f32.xlu0 %v1407
        %v1409 = vpop.xlane.xlu0 %1408
        %v1410 = vsel %vm428, %v1384, 0.0
        %1411 = vadd.xlane.f32.xlu0 %v1410
        %v1412 = vpop.xlane.xlu0 %1411
        %v1413 = vsel %vm428, %v1385, 0.0
        %1414 = vadd.xlane.f32.xlu0 %v1413
        %v1415 = vpop.xlane.xlu0 %1414
        %v1416 = vsel %vm428, %v1386, 0.0
        %1417 = vadd.xlane.f32.xlu0 %v1416
        %v1418 = vpop.xlane.xlu0 %1417
        %v1419 = vsel %vm428, %v1387, 0.0
        %1420 = vadd.xlane.f32.xlu0 %v1419
        %v1421 = vpop.xlane.xlu0 %1420
        %v1422 = vsel %vm428, %v1388, 0.0
        %1423 = vadd.xlane.f32.xlu0 %v1422
        %v1424 = vpop.xlane.xlu0 %1423
        %v1425 = vsel %vm428, %v1389, 0.0
        %1426 = vadd.xlane.f32.xlu0 %v1425
        %v1427 = vpop.xlane.xlu0 %1426
        %v1428 = vsel %vm428, %v1390, 0.0
        %1429 = vadd.xlane.f32.xlu0 %v1428
        %v1430 = vpop.xlane.xlu0 %1429
        %v1431 = vsel %vm428, %v1391, 0.0
        %1432 = vadd.xlane.f32.xlu0 %v1431
        %v1433 = vpop.xlane.xlu0 %1432
        %v1434 = vsel %vm428, %v1392, 0.0
        %1435 = vadd.xlane.f32.xlu0 %v1434
        %v1436 = vpop.xlane.xlu0 %1435
        %v1437 = vsel %vm428, %v1393, 0.0
        %1438 = vadd.xlane.f32.xlu0 %v1437
        %v1439 = vpop.xlane.xlu0 %1438
        %v1440 = vsel %vm428, %v1394, 0.0
        %1441 = vadd.xlane.f32.xlu0 %v1440
        %v1442 = vpop.xlane.xlu0 %1441
        %v1443 = vmul.f32 %v1397, %v1346
        %v1444 = vmul.f32 %v1400, %v1346
        %v1445 = vmul.f32 %v1403, %v1346
        %v1446 = vmul.f32 %v1406, %v1346
        %v1447 = vmul.f32 %v1409, %v1346
        %v1448 = vmul.f32 %v1412, %v1346
        %v1449 = vmul.f32 %v1415, %v1346
        %v1450 = vmul.f32 %v1418, %v1346
        %v1451 = vmul.f32 %v1421, %v1346
        %v1452 = vmul.f32 %v1424, %v1346
        %v1453 = vmul.f32 %v1427, %v1346
        %v1454 = vmul.f32 %v1430, %v1346
        %v1455 = vmul.f32 %v1433, %v1346
        %v1456 = vmul.f32 %v1436, %v1346
        %v1457 = vmul.f32 %v1439, %v1346
        %v1458 = vmul.f32 %v1442, %v1346
        %v1459 = vadd.f32 %v1443, 1e-05
        %v1460 = vadd.f32 %v1444, 1e-05
        %v1461 = vadd.f32 %v1445, 1e-05
        %v1462 = vadd.f32 %v1446, 1e-05
        %v1463 = vadd.f32 %v1447, 1e-05
        %v1464 = vadd.f32 %v1448, 1e-05
        %v1465 = vadd.f32 %v1449, 1e-05
        %v1466 = vadd.f32 %v1450, 1e-05
        %v1467 = vadd.f32 %v1451, 1e-05
        %v1468 = vadd.f32 %v1452, 1e-05
        %v1469 = vadd.f32 %v1453, 1e-05
        %v1470 = vadd.f32 %v1454, 1e-05
        %v1471 = vadd.f32 %v1455, 1e-05
        %v1472 = vadd.f32 %v1456, 1e-05
        %v1473 = vadd.f32 %v1457, 1e-05
        %v1474 = vadd.f32 %v1458, 1e-05
        %v1475 = vrsqrt.pop %v1459
        %v1476 = vrsqrt.pop %v1460
        %v1477 = vrsqrt.pop %v1461
        %v1478 = vrsqrt.pop %v1462
        %v1479 = vrsqrt.pop %v1463
        %v1480 = vrsqrt.pop %v1464
        %v1481 = vrsqrt.pop %v1465
        %v1482 = vrsqrt.pop %v1466
        %v1483 = vrsqrt.pop %v1467
        %v1484 = vrsqrt.pop %v1468
        %v1485 = vrsqrt.pop %v1469
        %v1486 = vrsqrt.pop %v1470
        %v1487 = vrsqrt.pop %v1471
        %v1488 = vrsqrt.pop %v1472
        %v1489 = vrsqrt.pop %v1473
        %v1490 = vrsqrt.pop %v1474
        %v1491 = vmul.f32 %v1363, %v1475
        %v1492 = vmul.f32 %v1364, %v1476
        %v1493 = vmul.f32 %v1365, %v1477
        %v1494 = vmul.f32 %v1366, %v1478
        %v1495 = vmul.f32 %v1367, %v1479
        %v1496 = vmul.f32 %v1368, %v1480
        %v1497 = vmul.f32 %v1369, %v1481
        %v1498 = vmul.f32 %v1370, %v1482
        %v1499 = vmul.f32 %v1371, %v1483
        %v1500 = vmul.f32 %v1372, %v1484
        %v1501 = vmul.f32 %v1373, %v1485
        %v1502 = vmul.f32 %v1374, %v1486
        %v1503 = vmul.f32 %v1375, %v1487
        %v1504 = vmul.f32 %v1376, %v1488
        %v1505 = vmul.f32 %v1377, %v1489
        %v1506 = vmul.f32 %v1378, %v1490
        %v1507 = vlaneseq
        %v1508 = vshrl.u32 %v1507, 7
        %v1509 = vsub.s32 6, %v1508
        %v1510 = vrot.slane %v378, %v1509
        %v1511 = vmul.f32 %v1491, %v1510
        %v1512 = vmul.f32 %v1492, %v1510
        %v1513 = vmul.f32 %v1493, %v1510
        %v1514 = vmul.f32 %v1494, %v1510
        %v1515 = vmul.f32 %v1495, %v1510
        %v1516 = vmul.f32 %v1496, %v1510
        %v1517 = vmul.f32 %v1497, %v1510
        %v1518 = vmul.f32 %v1498, %v1510
        %v1519 = vmul.f32 %v1499, %v1510
        %v1520 = vmul.f32 %v1500, %v1510
        %v1521 = vmul.f32 %v1501, %v1510
        %v1522 = vmul.f32 %v1502, %v1510
        %v1523 = vmul.f32 %v1503, %v1510
        %v1524 = vmul.f32 %v1504, %v1510
        %v1525 = vmul.f32 %v1505, %v1510
        %v1526 = vmul.f32 %v1506, %v1510
        %v1527 = vlaneseq
        %v1528 = vshrl.u32 %v1527, 7
        %v1529 = vsub.s32 7, %v1528
        %v1530 = vrot.slane %v378, %v1529
        %v1531 = vadd.f32 %v1511, %v1530
        %v1532 = vadd.f32 %v1512, %v1530
        %v1533 = vadd.f32 %v1513, %v1530
        %v1534 = vadd.f32 %v1514, %v1530
        %v1535 = vadd.f32 %v1515, %v1530
        %v1536 = vadd.f32 %v1516, %v1530
        %v1537 = vadd.f32 %v1517, %v1530
        %v1538 = vadd.f32 %v1518, %v1530
        %v1539 = vadd.f32 %v1519, %v1530
        %v1540 = vadd.f32 %v1520, %v1530
        %v1541 = vadd.f32 %v1521, %v1530
        %v1542 = vadd.f32 %v1522, %v1530
        %v1543 = vadd.f32 %v1523, %v1530
        %v1544 = vadd.f32 %v1524, %v1530
        %v1545 = vadd.f32 %v1525, %v1530
        %v1546 = vadd.f32 %v1526, %v1530
        %v1547 = vpack.c.bf16 %v1532, %v1531
        %v1548 = vpack.c.bf16 %v1534, %v1533
        %v1549 = vpack.c.bf16 %v1536, %v1535
        %v1550 = vpack.c.bf16 %v1538, %v1537
        %v1551 = vpack.c.bf16 %v1540, %v1539
        %v1552 = vpack.c.bf16 %v1542, %v1541
        %v1553 = vpack.c.bf16 %v1544, %v1543
        %v1554 = vpack.c.bf16 %v1546, %v1545
        %v1555 = vld [vmem:[%s3] sm:$0xf]
        %v1556 = vld [vmem:[%s3 + $0x4] sm:$0xf]
        %v1557 = vld [vmem:[%s3 + $0x8] sm:$0xf]
        %v1558 = vld [vmem:[%s3 + $0xc] sm:$0xf]
        %v1559 = vlaneseq
        %v1560 = vshrl.u32 %v1559, 7
        %v1561 = vsub.s32 4, %v1560
        %v1562 = vrot.slane %v378, %v1561
        %v1567 = vunpack.c.l.b16 %v1555
        %v1568 = vunpack.c.l.b16 %v1556
        %v1569 = vunpack.c.l.b16 %v1557
        %v1570 = vunpack.c.l.b16 %v1558
        %v1571 = vpack.c.b16 %v1568, %v1567
        %v1572 = vpack.c.b16 %v1570, %v1569
        %v1576 = vsel %vm428, %v1547, 0
        %v1579 = vsel %vm428, %v1548, 0
        %v1582 = vsel %vm428, %v1549, 0
        %v1585 = vsel %vm428, %v1550, 0
        %v1588 = vsel %vm428, %v1551, 0
        %v1591 = vsel %vm428, %v1552, 0
        %v1594 = vsel %vm428, %v1553, 0
        %v1597 = vsel %vm428, %v1554, 0
        %1599 = vmatprep.subr.bf16.mxu0 0
        %1600 = vmatpush1.bf16.msra.mxu0 %v1571
        %1601 = vmatprep.subr.bf16.mxu0 0
        %1602 = vmatpush1.bf16.msra.mxu0 %v1572
        %1603 = vmatprep.subr.bf16.mxu0 0
        %1604 = vmatpush1.bf16.msra.mxu0 0
        %1605 = vmatprep.subr.bf16.mxu0 0
        %1606 = vmatpush1.bf16.msra.mxu0 0
        %1607 = vmatprep.subr.bf16.mxu0 0
        %1608 = vmatpush1.bf16.msra.mxu0 0
        %1609 = vmatprep.subr.bf16.mxu0 0
        %1610 = vmatpush1.bf16.msra.mxu0 0
        %1611 = vmatprep.subr.bf16.mxu0 0
        %1612 = vmatpush1.bf16.msra.mxu0 0
        %1613 = vmatprep.subr.bf16.mxu0 0
        %1614 = vmatpush1.bf16.msra.mxu0 0
        %1615 = vmatprep.subr.bf16.mxu0 0
        %1616 = vmatpush1.bf16.msra.mxu0 0
        %1617 = vmatprep.subr.bf16.mxu0 0
        %1618 = vmatpush1.bf16.msra.mxu0 0
        %1619 = vmatprep.subr.bf16.mxu0 0
        %1620 = vmatpush1.bf16.msra.mxu0 0
        %1621 = vmatprep.subr.bf16.mxu0 0
        %1622 = vmatpush1.bf16.msra.mxu0 0
        %1623 = vmatprep.subr.bf16.mxu0 0
        %1624 = vmatpush1.bf16.msra.mxu0 0
        %1625 = vmatprep.subr.bf16.mxu0 0
        %1626 = vmatpush1.bf16.msra.mxu0 0
        %1627 = vmatprep.subr.bf16.mxu0 0
        %1628 = vmatpush1.bf16.msra.mxu0 0
        %1629 = vmatprep.subr.bf16.mxu0 0
        %1630 = vmatpush1.bf16.msra.mxu0 0
        %1631 = vmatprep.mubr.bf16.mxu0 0
        %1632 = vmatmul.mubr.bf16.gmra.mrb[0].mxu0 %v1576
        %v1633 = vpop.f32.mrb[0].mxu0
        %v1634 = vadd.f32 %v1562, %v1633
        %v1635 = vpop.f32.mrb[0].mxu0
        %v1636 = vpop.f32.mrb[0].mxu0
        %v1637 = vadd.f32 %v1562, %v1636
        %v1638 = vpop.f32.mrb[0].mxu0
        %1639 = vmatprep.mubr.bf16.mxu0 0
        %1640 = vmatmul.mubr.bf16.gmra.mrb[0].mxu0 %v1579
        %v1641 = vpop.f32.mrb[0].mxu0
        %v1642 = vadd.f32 %v1562, %v1641
        %v1643 = vpop.f32.mrb[0].mxu0
        %v1644 = vpop.f32.mrb[0].mxu0
        %v1645 = vadd.f32 %v1562, %v1644
        %v1646 = vpop.f32.mrb[0].mxu0
        %1647 = vmatprep.mubr.bf16.mxu0 0
        %1648 = vmatmul.mubr.bf16.gmra.mrb[0].mxu0 %v1582
        %v1649 = vpop.f32.mrb[0].mxu0
        %v1650 = vadd.f32 %v1562, %v1649
        %v1651 = vpop.f32.mrb[0].mxu0
        %v1652 = vpop.f32.mrb[0].mxu0
        %v1653 = vadd.f32 %v1562, %v1652
        %v1654 = vpop.f32.mrb[0].mxu0
        %1655 = vmatprep.mubr.bf16.mxu0 0
        %1656 = vmatmul.mubr.bf16.gmra.mrb[0].mxu0 %v1585
        %v1657 = vpop.f32.mrb[0].mxu0
        %v1658 = vadd.f32 %v1562, %v1657
        %v1659 = vpop.f32.mrb[0].mxu0
        %v1660 = vpop.f32.mrb[0].mxu0
        %v1661 = vadd.f32 %v1562, %v1660
        %v1662 = vpop.f32.mrb[0].mxu0
        %1663 = vmatprep.mubr.bf16.mxu0 0
        %1664 = vmatmul.mubr.bf16.gmra.mrb[0].mxu0 %v1588
        %v1665 = vpop.f32.mrb[0].mxu0
        %v1666 = vadd.f32 %v1562, %v1665
        %v1667 = vpop.f32.mrb[0].mxu0
        %v1668 = vpop.f32.mrb[0].mxu0
        %v1669 = vadd.f32 %v1562, %v1668
        %v1670 = vpop.f32.mrb[0].mxu0
        %1671 = vmatprep.mubr.bf16.mxu0 0
        %1672 = vmatmul.mubr.bf16.gmra.mrb[0].mxu0 %v1591
        %v1673 = vpop.f32.mrb[0].mxu0
        %v1674 = vadd.f32 %v1562, %v1673
        %v1675 = vpop.f32.mrb[0].mxu0
        %v1676 = vpop.f32.mrb[0].mxu0
        %v1677 = vadd.f32 %v1562, %v1676
        %v1678 = vpop.f32.mrb[0].mxu0
        %1679 = vmatprep.mubr.bf16.mxu0 0
        %1680 = vmatmul.mubr.bf16.gmra.mrb[0].mxu0 %v1594
        %v1681 = vpop.f32.mrb[0].mxu0
        %v1682 = vadd.f32 %v1562, %v1681
        %v1683 = vpop.f32.mrb[0].mxu0
        %v1684 = vpop.f32.mrb[0].mxu0
        %v1685 = vadd.f32 %v1562, %v1684
        %v1686 = vpop.f32.mrb[0].mxu0
        %1687 = vmatprep.mubr.bf16.mxu0 0
        %1688 = vmatmul.mubr.bf16.gmra.mrb[0].mxu0 %v1597
        %v1689 = vpop.f32.mrb[0].mxu0
        %v1690 = vadd.f32 %v1562, %v1689
        %v1691 = vpop.f32.mrb[0].mxu0
        %v1692 = vpop.f32.mrb[0].mxu0
        %v1693 = vadd.f32 %v1562, %v1692
        %v1694 = vpop.f32.mrb[0].mxu0
        %1695 = vdwg.mxu0
        %v1696 = vmax.f32 %v1634, 0.0
        %v1697 = vmax.f32 %v1637, 0.0
        %v1698 = vmax.f32 %v1642, 0.0
        %v1699 = vmax.f32 %v1645, 0.0
        %v1700 = vmax.f32 %v1650, 0.0
        %v1701 = vmax.f32 %v1653, 0.0
        %v1702 = vmax.f32 %v1658, 0.0
        %v1703 = vmax.f32 %v1661, 0.0
        %v1704 = vmax.f32 %v1666, 0.0
        %v1705 = vmax.f32 %v1669, 0.0
        %v1706 = vmax.f32 %v1674, 0.0
        %v1707 = vmax.f32 %v1677, 0.0
        %v1708 = vmax.f32 %v1682, 0.0
        %v1709 = vmax.f32 %v1685, 0.0
        %v1710 = vmax.f32 %v1690, 0.0
        %v1711 = vmax.f32 %v1693, 0.0
        %v1712 = vpack.c.bf16 %v1697, %v1696
        %v1713 = vpack.c.bf16 %v1699, %v1698
        %v1714 = vpack.c.bf16 %v1701, %v1700
        %v1715 = vpack.c.bf16 %v1703, %v1702
        %v1716 = vpack.c.bf16 %v1705, %v1704
        %v1717 = vpack.c.bf16 %v1707, %v1706
        %v1718 = vpack.c.bf16 %v1709, %v1708
        %v1719 = vpack.c.bf16 %v1711, %v1710
        %v1720 = vld [vmem:[%s4] sm:$0xf]
        %v1721 = vld [vmem:[%s4 + $0x4] sm:$0xf]
        %v1722 = vld [vmem:[%s4 + $0x8] sm:$0xf]
        %v1723 = vld [vmem:[%s4 + $0xc] sm:$0xf]
        %v1724 = vld [vmem:[%s4 + $0x10] sm:$0xf]
        %v1725 = vld [vmem:[%s4 + $0x14] sm:$0xf]
        %v1726 = vld [vmem:[%s4 + $0x18] sm:$0xf]
        %v1727 = vld [vmem:[%s4 + $0x1c] sm:$0xf]
        %v1728 = vlaneseq
        %v1729 = vshrl.u32 %v1728, 7
        %v1730 = vsub.s32 5, %v1729
        %v1731 = vrot.slane %v378, %v1730
        %v1740 = vunpack.c.l.b16 %v1720
        %v1741 = vunpack.c.l.b16 %v1721
        %v1742 = vunpack.c.l.b16 %v1722
        %v1743 = vunpack.c.l.b16 %v1723
        %v1744 = vunpack.c.l.b16 %v1724
        %v1745 = vunpack.c.l.b16 %v1725
        %v1746 = vunpack.c.l.b16 %v1726
        %v1747 = vunpack.c.l.b16 %v1727
        %v1748 = vpack.c.b16 %v1741, %v1740
        %v1749 = vpack.c.b16 %v1743, %v1742
        %v1750 = vpack.c.b16 %v1745, %v1744
        %v1751 = vpack.c.b16 %v1747, %v1746
        %vm1756 = vcmask 523264
        %v1758 = vsel %vm1756, %v1712, 0
        %v1761 = vsel %vm1756, %v1713, 0
        %v1764 = vsel %vm1756, %v1714, 0
        %v1767 = vsel %vm1756, %v1715, 0
        %v1770 = vsel %vm1756, %v1716, 0
        %v1773 = vsel %vm1756, %v1717, 0
        %v1776 = vsel %vm1756, %v1718, 0
        %v1779 = vsel %vm1756, %v1719, 0
        %1781 = vmatprep.subr.bf16.mxu0 0
        %1782 = vmatpush1.bf16.msra.mxu0 %v1748
        %1783 = vmatprep.subr.bf16.mxu0 0
        %1784 = vmatpush1.bf16.msra.mxu0 %v1749
        %1785 = vmatprep.subr.bf16.mxu0 0
        %1786 = vmatpush1.bf16.msra.mxu0 %v1750
        %1787 = vmatprep.subr.bf16.mxu0 0
        %1788 = vmatpush1.bf16.msra.mxu0 %v1751
        %1789 = vmatprep.subr.bf16.mxu0 0
        %1790 = vmatpush1.bf16.msra.mxu0 0
        %1791 = vmatprep.subr.bf16.mxu0 0
        %1792 = vmatpush1.bf16.msra.mxu0 0
        %1793 = vmatprep.subr.bf16.mxu0 0
        %1794 = vmatpush1.bf16.msra.mxu0 0
        %1795 = vmatprep.subr.bf16.mxu0 0
        %1796 = vmatpush1.bf16.msra.mxu0 0
        %1797 = vmatprep.subr.bf16.mxu0 0
        %1798 = vmatpush1.bf16.msra.mxu0 0
        %1799 = vmatprep.subr.bf16.mxu0 0
        %1800 = vmatpush1.bf16.msra.mxu0 0
        %1801 = vmatprep.subr.bf16.mxu0 0
        %1802 = vmatpush1.bf16.msra.mxu0 0
        %1803 = vmatprep.subr.bf16.mxu0 0
        %1804 = vmatpush1.bf16.msra.mxu0 0
        %1805 = vmatprep.subr.bf16.mxu0 0
        %1806 = vmatpush1.bf16.msra.mxu0 0
        %1807 = vmatprep.subr.bf16.mxu0 0
        %1808 = vmatpush1.bf16.msra.mxu0 0
        %1809 = vmatprep.subr.bf16.mxu0 0
        %1810 = vmatpush1.bf16.msra.mxu0 0
        %1811 = vmatprep.subr.bf16.mxu0 0
        %1812 = vmatpush1.bf16.msra.mxu0 0
        %1813 = vmatprep.mubr.bf16.mxu0 0
        %1814 = vmatmul.mubr.bf16.gmra.mrb[0].mxu0 %v1758
        %v1815 = vpop.f32.mrb[0].mxu0
        %v1816 = vadd.f32 %v1731, %v1815
        %v1817 = vpop.f32.mrb[0].mxu0
        %v1818 = vpop.f32.mrb[0].mxu0
        %v1819 = vadd.f32 %v1731, %v1818
        %v1820 = vpop.f32.mrb[0].mxu0
        %1821 = vmatprep.mubr.bf16.mxu0 0
        %1822 = vmatmul.mubr.bf16.gmra.mrb[0].mxu0 %v1761
        %v1823 = vpop.f32.mrb[0].mxu0
        %v1824 = vadd.f32 %v1731, %v1823
        %v1825 = vpop.f32.mrb[0].mxu0
        %v1826 = vpop.f32.mrb[0].mxu0
        %v1827 = vadd.f32 %v1731, %v1826
        %v1828 = vpop.f32.mrb[0].mxu0
        %1829 = vmatprep.mubr.bf16.mxu0 0
        %1830 = vmatmul.mubr.bf16.gmra.mrb[0].mxu0 %v1764
        %v1831 = vpop.f32.mrb[0].mxu0
        %v1832 = vadd.f32 %v1731, %v1831
        %v1833 = vpop.f32.mrb[0].mxu0
        %v1834 = vpop.f32.mrb[0].mxu0
        %v1835 = vadd.f32 %v1731, %v1834
        %v1836 = vpop.f32.mrb[0].mxu0
        %1837 = vmatprep.mubr.bf16.mxu0 0
        %1838 = vmatmul.mubr.bf16.gmra.mrb[0].mxu0 %v1767
        %v1839 = vpop.f32.mrb[0].mxu0
        %v1840 = vadd.f32 %v1731, %v1839
        %v1841 = vpop.f32.mrb[0].mxu0
        %v1842 = vpop.f32.mrb[0].mxu0
        %v1843 = vadd.f32 %v1731, %v1842
        %v1844 = vpop.f32.mrb[0].mxu0
        %1845 = vmatprep.mubr.bf16.mxu0 0
        %1846 = vmatmul.mubr.bf16.gmra.mrb[0].mxu0 %v1770
        %v1847 = vpop.f32.mrb[0].mxu0
        %v1848 = vadd.f32 %v1731, %v1847
        %v1849 = vpop.f32.mrb[0].mxu0
        %v1850 = vpop.f32.mrb[0].mxu0
        %v1851 = vadd.f32 %v1731, %v1850
        %v1852 = vpop.f32.mrb[0].mxu0
        %1853 = vmatprep.mubr.bf16.mxu0 0
        %1854 = vmatmul.mubr.bf16.gmra.mrb[0].mxu0 %v1773
        %v1855 = vpop.f32.mrb[0].mxu0
        %v1856 = vadd.f32 %v1731, %v1855
        %v1857 = vpop.f32.mrb[0].mxu0
        %v1858 = vpop.f32.mrb[0].mxu0
        %v1859 = vadd.f32 %v1731, %v1858
        %v1860 = vpop.f32.mrb[0].mxu0
        %1861 = vmatprep.mubr.bf16.mxu0 0
        %1862 = vmatmul.mubr.bf16.gmra.mrb[0].mxu0 %v1776
        %v1863 = vpop.f32.mrb[0].mxu0
        %v1864 = vadd.f32 %v1731, %v1863
        %v1865 = vpop.f32.mrb[0].mxu0
        %v1866 = vpop.f32.mrb[0].mxu0
        %v1867 = vadd.f32 %v1731, %v1866
        %v1868 = vpop.f32.mrb[0].mxu0
        %1869 = vmatprep.mubr.bf16.mxu0 0
        %1870 = vmatmul.mubr.bf16.gmra.mrb[0].mxu0 %v1779
        %v1871 = vpop.f32.mrb[0].mxu0
        %v1872 = vadd.f32 %v1731, %v1871
        %v1873 = vpop.f32.mrb[0].mxu0
        %v1874 = vpop.f32.mrb[0].mxu0
        %v1875 = vadd.f32 %v1731, %v1874
        %v1876 = vpop.f32.mrb[0].mxu0
        %1877 = vdwg.mxu0
        %v1878 = vadd.f32 %v1531, %v1816
        %v1879 = vadd.f32 %v1532, %v1819
        %v1880 = vadd.f32 %v1533, %v1824
        %v1881 = vadd.f32 %v1534, %v1827
        %v1882 = vadd.f32 %v1535, %v1832
        %v1883 = vadd.f32 %v1536, %v1835
        %v1884 = vadd.f32 %v1537, %v1840
        %v1885 = vadd.f32 %v1538, %v1843
        %v1886 = vadd.f32 %v1539, %v1848
        %v1887 = vadd.f32 %v1540, %v1851
        %v1888 = vadd.f32 %v1541, %v1856
        %v1889 = vadd.f32 %v1542, %v1859
        %v1890 = vadd.f32 %v1543, %v1864
        %v1891 = vadd.f32 %v1544, %v1867
        %v1892 = vadd.f32 %v1545, %v1872
        %v1893 = vadd.f32 %v1546, %v1875
        %v1894 = vsel %vm428, %v1878, 0.0
        %1895 = vadd.xlane.f32.xlu0 %v1894
        %v1896 = vpop.xlane.xlu0 %1895
        %v1897 = vsel %vm428, %v1879, 0.0
        %1898 = vadd.xlane.f32.xlu0 %v1897
        %v1899 = vpop.xlane.xlu0 %1898
        %v1900 = vsel %vm428, %v1880, 0.0
        %1901 = vadd.xlane.f32.xlu0 %v1900
        %v1902 = vpop.xlane.xlu0 %1901
        %v1903 = vsel %vm428, %v1881, 0.0
        %1904 = vadd.xlane.f32.xlu0 %v1903
        %v1905 = vpop.xlane.xlu0 %1904
        %v1906 = vsel %vm428, %v1882, 0.0
        %1907 = vadd.xlane.f32.xlu0 %v1906
        %v1908 = vpop.xlane.xlu0 %1907
        %v1909 = vsel %vm428, %v1883, 0.0
        %1910 = vadd.xlane.f32.xlu0 %v1909
        %v1911 = vpop.xlane.xlu0 %1910
        %v1912 = vsel %vm428, %v1884, 0.0
        %1913 = vadd.xlane.f32.xlu0 %v1912
        %v1914 = vpop.xlane.xlu0 %1913
        %v1915 = vsel %vm428, %v1885, 0.0
        %1916 = vadd.xlane.f32.xlu0 %v1915
        %v1917 = vpop.xlane.xlu0 %1916
        %v1918 = vsel %vm428, %v1886, 0.0
        %1919 = vadd.xlane.f32.xlu0 %v1918
        %v1920 = vpop.xlane.xlu0 %1919
        %v1921 = vsel %vm428, %v1887, 0.0
        %1922 = vadd.xlane.f32.xlu0 %v1921
        %v1923 = vpop.xlane.xlu0 %1922
        %v1924 = vsel %vm428, %v1888, 0.0
        %1925 = vadd.xlane.f32.xlu0 %v1924
        %v1926 = vpop.xlane.xlu0 %1925
        %v1927 = vsel %vm428, %v1889, 0.0
        %1928 = vadd.xlane.f32.xlu0 %v1927
        %v1929 = vpop.xlane.xlu0 %1928
        %v1930 = vsel %vm428, %v1890, 0.0
        %1931 = vadd.xlane.f32.xlu0 %v1930
        %v1932 = vpop.xlane.xlu0 %1931
        %v1933 = vsel %vm428, %v1891, 0.0
        %1934 = vadd.xlane.f32.xlu0 %v1933
        %v1935 = vpop.xlane.xlu0 %1934
        %v1936 = vsel %vm428, %v1892, 0.0
        %1937 = vadd.xlane.f32.xlu0 %v1936
        %v1938 = vpop.xlane.xlu0 %1937
        %v1939 = vsel %vm428, %v1893, 0.0
        %1940 = vadd.xlane.f32.xlu0 %v1939
        %v1941 = vpop.xlane.xlu0 %1940
        %v1942 = vmul.f32 %v1896, %v1346
        %v1943 = vmul.f32 %v1899, %v1346
        %v1944 = vmul.f32 %v1902, %v1346
        %v1945 = vmul.f32 %v1905, %v1346
        %v1946 = vmul.f32 %v1908, %v1346
        %v1947 = vmul.f32 %v1911, %v1346
        %v1948 = vmul.f32 %v1914, %v1346
        %v1949 = vmul.f32 %v1917, %v1346
        %v1950 = vmul.f32 %v1920, %v1346
        %v1951 = vmul.f32 %v1923, %v1346
        %v1952 = vmul.f32 %v1926, %v1346
        %v1953 = vmul.f32 %v1929, %v1346
        %v1954 = vmul.f32 %v1932, %v1346
        %v1955 = vmul.f32 %v1935, %v1346
        %v1956 = vmul.f32 %v1938, %v1346
        %v1957 = vmul.f32 %v1941, %v1346
        %v1958 = vsub.f32 %v1878, %v1942
        %v1959 = vsub.f32 %v1879, %v1943
        %v1960 = vsub.f32 %v1880, %v1944
        %v1961 = vsub.f32 %v1881, %v1945
        %v1962 = vsub.f32 %v1882, %v1946
        %v1963 = vsub.f32 %v1883, %v1947
        %v1964 = vsub.f32 %v1884, %v1948
        %v1965 = vsub.f32 %v1885, %v1949
        %v1966 = vsub.f32 %v1886, %v1950
        %v1967 = vsub.f32 %v1887, %v1951
        %v1968 = vsub.f32 %v1888, %v1952
        %v1969 = vsub.f32 %v1889, %v1953
        %v1970 = vsub.f32 %v1890, %v1954
        %v1971 = vsub.f32 %v1891, %v1955
        %v1972 = vsub.f32 %v1892, %v1956
        %v1973 = vsub.f32 %v1893, %v1957
        %v1974 = vmul.f32 %v1958, %v1958
        %v1975 = vmul.f32 %v1959, %v1959
        %v1976 = vmul.f32 %v1960, %v1960
        %v1977 = vmul.f32 %v1961, %v1961
        %v1978 = vmul.f32 %v1962, %v1962
        %v1979 = vmul.f32 %v1963, %v1963
        %v1980 = vmul.f32 %v1964, %v1964
        %v1981 = vmul.f32 %v1965, %v1965
        %v1982 = vmul.f32 %v1966, %v1966
        %v1983 = vmul.f32 %v1967, %v1967
        %v1984 = vmul.f32 %v1968, %v1968
        %v1985 = vmul.f32 %v1969, %v1969
        %v1986 = vmul.f32 %v1970, %v1970
        %v1987 = vmul.f32 %v1971, %v1971
        %v1988 = vmul.f32 %v1972, %v1972
        %v1989 = vmul.f32 %v1973, %v1973
        %v1990 = vsel %vm428, %v1974, 0.0
        %1991 = vadd.xlane.f32.xlu0 %v1990
        %v1992 = vpop.xlane.xlu0 %1991
        %v1993 = vsel %vm428, %v1975, 0.0
        %1994 = vadd.xlane.f32.xlu0 %v1993
        %v1995 = vpop.xlane.xlu0 %1994
        %v1996 = vsel %vm428, %v1976, 0.0
        %1997 = vadd.xlane.f32.xlu0 %v1996
        %v1998 = vpop.xlane.xlu0 %1997
        %v1999 = vsel %vm428, %v1977, 0.0
        %2000 = vadd.xlane.f32.xlu0 %v1999
        %v2001 = vpop.xlane.xlu0 %2000
        %v2002 = vsel %vm428, %v1978, 0.0
        %2003 = vadd.xlane.f32.xlu0 %v2002
        %v2004 = vpop.xlane.xlu0 %2003
        %v2005 = vsel %vm428, %v1979, 0.0
        %2006 = vadd.xlane.f32.xlu0 %v2005
        %v2007 = vpop.xlane.xlu0 %2006
        %v2008 = vsel %vm428, %v1980, 0.0
        %2009 = vadd.xlane.f32.xlu0 %v2008
        %v2010 = vpop.xlane.xlu0 %2009
        %v2011 = vsel %vm428, %v1981, 0.0
        %2012 = vadd.xlane.f32.xlu0 %v2011
        %v2013 = vpop.xlane.xlu0 %2012
        %v2014 = vsel %vm428, %v1982, 0.0
        %2015 = vadd.xlane.f32.xlu0 %v2014
        %v2016 = vpop.xlane.xlu0 %2015
        %v2017 = vsel %vm428, %v1983, 0.0
        %2018 = vadd.xlane.f32.xlu0 %v2017
        %v2019 = vpop.xlane.xlu0 %2018
        %v2020 = vsel %vm428, %v1984, 0.0
        %2021 = vadd.xlane.f32.xlu0 %v2020
        %v2022 = vpop.xlane.xlu0 %2021
        %v2023 = vsel %vm428, %v1985, 0.0
        %2024 = vadd.xlane.f32.xlu0 %v2023
        %v2025 = vpop.xlane.xlu0 %2024
        %v2026 = vsel %vm428, %v1986, 0.0
        %2027 = vadd.xlane.f32.xlu0 %v2026
        %v2028 = vpop.xlane.xlu0 %2027
        %v2029 = vsel %vm428, %v1987, 0.0
        %2030 = vadd.xlane.f32.xlu0 %v2029
        %v2031 = vpop.xlane.xlu0 %2030
        %v2032 = vsel %vm428, %v1988, 0.0
        %2033 = vadd.xlane.f32.xlu0 %v2032
        %v2034 = vpop.xlane.xlu0 %2033
        %v2035 = vsel %vm428, %v1989, 0.0
        %2036 = vadd.xlane.f32.xlu0 %v2035
        %v2037 = vpop.xlane.xlu0 %2036
        %v2038 = vmul.f32 %v1992, %v1346
        %v2039 = vmul.f32 %v1995, %v1346
        %v2040 = vmul.f32 %v1998, %v1346
        %v2041 = vmul.f32 %v2001, %v1346
        %v2042 = vmul.f32 %v2004, %v1346
        %v2043 = vmul.f32 %v2007, %v1346
        %v2044 = vmul.f32 %v2010, %v1346
        %v2045 = vmul.f32 %v2013, %v1346
        %v2046 = vmul.f32 %v2016, %v1346
        %v2047 = vmul.f32 %v2019, %v1346
        %v2048 = vmul.f32 %v2022, %v1346
        %v2049 = vmul.f32 %v2025, %v1346
        %v2050 = vmul.f32 %v2028, %v1346
        %v2051 = vmul.f32 %v2031, %v1346
        %v2052 = vmul.f32 %v2034, %v1346
        %v2053 = vmul.f32 %v2037, %v1346
        %v2054 = vadd.f32 %v2038, 1e-05
        %v2055 = vadd.f32 %v2039, 1e-05
        %v2056 = vadd.f32 %v2040, 1e-05
        %v2057 = vadd.f32 %v2041, 1e-05
        %v2058 = vadd.f32 %v2042, 1e-05
        %v2059 = vadd.f32 %v2043, 1e-05
        %v2060 = vadd.f32 %v2044, 1e-05
        %v2061 = vadd.f32 %v2045, 1e-05
        %v2062 = vadd.f32 %v2046, 1e-05
        %v2063 = vadd.f32 %v2047, 1e-05
        %v2064 = vadd.f32 %v2048, 1e-05
        %v2065 = vadd.f32 %v2049, 1e-05
        %v2066 = vadd.f32 %v2050, 1e-05
        %v2067 = vadd.f32 %v2051, 1e-05
        %v2068 = vadd.f32 %v2052, 1e-05
        %v2069 = vadd.f32 %v2053, 1e-05
        %v2070 = vrsqrt.pop %v2054
        %v2071 = vrsqrt.pop %v2055
        %v2072 = vrsqrt.pop %v2056
        %v2073 = vrsqrt.pop %v2057
        %v2074 = vrsqrt.pop %v2058
        %v2075 = vrsqrt.pop %v2059
        %v2076 = vrsqrt.pop %v2060
        %v2077 = vrsqrt.pop %v2061
        %v2078 = vrsqrt.pop %v2062
        %v2079 = vrsqrt.pop %v2063
        %v2080 = vrsqrt.pop %v2064
        %v2081 = vrsqrt.pop %v2065
        %v2082 = vrsqrt.pop %v2066
        %v2083 = vrsqrt.pop %v2067
        %v2084 = vrsqrt.pop %v2068
        %v2085 = vrsqrt.pop %v2069
        %v2086 = vmul.f32 %v1958, %v2070
        %v2087 = vmul.f32 %v1959, %v2071
        %v2088 = vmul.f32 %v1960, %v2072
        %v2089 = vmul.f32 %v1961, %v2073
        %v2090 = vmul.f32 %v1962, %v2074
        %v2091 = vmul.f32 %v1963, %v2075
        %v2092 = vmul.f32 %v1964, %v2076
        %v2093 = vmul.f32 %v1965, %v2077
        %v2094 = vmul.f32 %v1966, %v2078
        %v2095 = vmul.f32 %v1967, %v2079
        %v2096 = vmul.f32 %v1968, %v2080
        %v2097 = vmul.f32 %v1969, %v2081
        %v2098 = vmul.f32 %v1970, %v2082
        %v2099 = vmul.f32 %v1971, %v2083
        %v2100 = vmul.f32 %v1972, %v2084
        %v2101 = vmul.f32 %v1973, %v2085
        %v2102 = vlaneseq
        %v2103 = vshrl.u32 %v2102, 7
        %v2104 = vsub.s32 0, %v2103
        %v2105 = vrot.slane %v379, %v2104
        %v2106 = vmul.f32 %v2086, %v2105
        %v2107 = vmul.f32 %v2087, %v2105
        %v2108 = vmul.f32 %v2088, %v2105
        %v2109 = vmul.f32 %v2089, %v2105
        %v2110 = vmul.f32 %v2090, %v2105
        %v2111 = vmul.f32 %v2091, %v2105
        %v2112 = vmul.f32 %v2092, %v2105
        %v2113 = vmul.f32 %v2093, %v2105
        %v2114 = vmul.f32 %v2094, %v2105
        %v2115 = vmul.f32 %v2095, %v2105
        %v2116 = vmul.f32 %v2096, %v2105
        %v2117 = vmul.f32 %v2097, %v2105
        %v2118 = vmul.f32 %v2098, %v2105
        %v2119 = vmul.f32 %v2099, %v2105
        %v2120 = vmul.f32 %v2100, %v2105
        %v2121 = vmul.f32 %v2101, %v2105
        %v2122 = vlaneseq
        %v2123 = vshrl.u32 %v2122, 7
        %v2124 = vsub.s32 1, %v2123
        %v2125 = vrot.slane %v379, %v2124
        %v2126 = vadd.f32 %v2106, %v2125
        %v2127 = vadd.f32 %v2107, %v2125
        %v2128 = vadd.f32 %v2108, %v2125
        %v2129 = vadd.f32 %v2109, %v2125
        %v2130 = vadd.f32 %v2110, %v2125
        %v2131 = vadd.f32 %v2111, %v2125
        %v2132 = vadd.f32 %v2112, %v2125
        %v2133 = vadd.f32 %v2113, %v2125
        %v2134 = vadd.f32 %v2114, %v2125
        %v2135 = vadd.f32 %v2115, %v2125
        %v2136 = vadd.f32 %v2116, %v2125
        %v2137 = vadd.f32 %v2117, %v2125
        %v2138 = vadd.f32 %v2118, %v2125
        %v2139 = vadd.f32 %v2119, %v2125
        %v2140 = vadd.f32 %v2120, %v2125
        %v2141 = vadd.f32 %v2121, %v2125
        %v2142 = vld [vmem:[%s9] sm:$0xf]
        %v2143 = vld [vmem:[%s9 + $0x4] sm:$0xf]
        %v2144 = vpack.c.bf16 %v2127, %v2126
        %v2145 = vpack.c.bf16 %v2129, %v2128
        %v2146 = vpack.c.bf16 %v2131, %v2130
        %v2147 = vpack.c.bf16 %v2133, %v2132
        %v2148 = vpack.c.bf16 %v2135, %v2134
        %v2149 = vpack.c.bf16 %v2137, %v2136
        %v2150 = vpack.c.bf16 %v2139, %v2138
        %v2151 = vpack.c.bf16 %v2141, %v2140
        %v2154 = vunpack.c.l.b16 %v2142
        %v2155 = vunpack.c.l.b16 %v2143
        %v2156 = vpack.c.b16 %v2155, %v2154
        %2158 = vmatprep.subr.bf16.mxu0 0
        %2159 = vmatpush1.bf16.msra.mxu0 %v2144
        %2160 = vmatprep.subr.bf16.mxu0 0
        %2161 = vmatpush1.bf16.msra.mxu0 %v2145
        %2162 = vmatprep.subr.bf16.mxu0 0
        %2163 = vmatpush1.bf16.msra.mxu0 %v2146
        %2164 = vmatprep.subr.bf16.mxu0 0
        %2165 = vmatpush1.bf16.msra.mxu0 %v2147
        %2166 = vmatprep.subr.bf16.mxu0 0
        %2167 = vmatpush1.bf16.msra.mxu0 %v2148
        %2168 = vmatprep.subr.bf16.mxu0 0
        %2169 = vmatpush1.bf16.msra.mxu0 %v2149
        %2170 = vmatprep.subr.bf16.mxu0 0
        %2171 = vmatpush1.bf16.msra.mxu0 %v2150
        %2172 = vmatprep.subr.bf16.mxu0 0
        %2173 = vmatpush1.bf16.msra.mxu0 %v2151
        %2174 = vmatprep.subr.bf16.mxu0 0
        %2175 = vmatpush1.bf16.msra.mxu0 0
        %2176 = vmatprep.subr.bf16.mxu0 0
        %2177 = vmatpush1.bf16.msra.mxu0 0
        %2178 = vmatprep.subr.bf16.mxu0 0
        %2179 = vmatpush1.bf16.msra.mxu0 0
        %2180 = vmatprep.subr.bf16.mxu0 0
        %2181 = vmatpush1.bf16.msra.mxu0 0
        %2182 = vmatprep.subr.bf16.mxu0 0
        %2183 = vmatpush1.bf16.msra.mxu0 0
        %2184 = vmatprep.subr.bf16.mxu0 0
        %2185 = vmatpush1.bf16.msra.mxu0 0
        %2186 = vmatprep.subr.bf16.mxu0 0
        %2187 = vmatpush1.bf16.msra.mxu0 0
        %2188 = vmatprep.subr.bf16.mxu0 0
        %2189 = vmatpush1.bf16.msra.mxu0 0
        %2190 = vmatprep.mubr.bf16.mxu0 0
        %2191 = vmatmul.mubr.bf16.gmra.mrb[0].mxu0 %v2156
        %v2192 = vpop.f32.mrb[0].mxu0
        %v2193 = vadd.f32 0.0, %v2192
        %v2194 = vpop.f32.mrb[0].mxu0
        %v2195 = vpop.f32.mrb[0].mxu0
        %v2196 = vadd.f32 0.0, %v2195
        %v2197 = vpop.f32.mrb[0].mxu0
        %2198 = vdwg.mxu0
        %v2199 = vpack.c.bf16 %v2196, %v2193
        %v2200 = vld [vmem:[%s5] sm:$0xf]
        %v2201 = vld [vmem:[%s5 + $0x4] sm:$0xf]
        %v2202 = vld [vmem:[%s5 + $0x8] sm:$0xf]
        %v2203 = vld [vmem:[%s5 + $0xc] sm:$0xf]
        %v2204 = vlaneseq
        %v2205 = vshrl.u32 %v2204, 7
        %v2206 = vsub.s32 2, %v2205
        %v2207 = vrot.slane %v379, %v2206
        %v2212 = vunpack.c.l.b16 %v2200
        %v2213 = vunpack.c.l.b16 %v2201
        %v2214 = vunpack.c.l.b16 %v2202
        %v2215 = vunpack.c.l.b16 %v2203
        %v2216 = vpack.c.b16 %v2213, %v2212
        %v2217 = vpack.c.b16 %v2215, %v2214
        %v2221 = vsel %vm428, %v2199, 0
        %2223 = vmatprep.subr.bf16.mxu0 0
        %2224 = vmatpush1.bf16.msra.mxu0 %v2216
        %2225 = vmatprep.subr.bf16.mxu0 0
        %2226 = vmatpush1.bf16.msra.mxu0 %v2217
        %2227 = vmatprep.subr.bf16.mxu0 0
        %2228 = vmatpush1.bf16.msra.mxu0 0
        %2229 = vmatprep.subr.bf16.mxu0 0
        %2230 = vmatpush1.bf16.msra.mxu0 0
        %2231 = vmatprep.subr.bf16.mxu0 0
        %2232 = vmatpush1.bf16.msra.mxu0 0
        %2233 = vmatprep.subr.bf16.mxu0 0
        %2234 = vmatpush1.bf16.msra.mxu0 0
        %2235 = vmatprep.subr.bf16.mxu0 0
        %2236 = vmatpush1.bf16.msra.mxu0 0
        %2237 = vmatprep.subr.bf16.mxu0 0
        %2238 = vmatpush1.bf16.msra.mxu0 0
        %2239 = vmatprep.subr.bf16.mxu0 0
        %2240 = vmatpush1.bf16.msra.mxu0 0
        %2241 = vmatprep.subr.bf16.mxu0 0
        %2242 = vmatpush1.bf16.msra.mxu0 0
        %2243 = vmatprep.subr.bf16.mxu0 0
        %2244 = vmatpush1.bf16.msra.mxu0 0
        %2245 = vmatprep.subr.bf16.mxu0 0
        %2246 = vmatpush1.bf16.msra.mxu0 0
        %2247 = vmatprep.subr.bf16.mxu0 0
        %2248 = vmatpush1.bf16.msra.mxu0 0
        %2249 = vmatprep.subr.bf16.mxu0 0
        %2250 = vmatpush1.bf16.msra.mxu0 0
        %2251 = vmatprep.subr.bf16.mxu0 0
        %2252 = vmatpush1.bf16.msra.mxu0 0
        %2253 = vmatprep.subr.bf16.mxu0 0
        %2254 = vmatpush1.bf16.msra.mxu0 0
        %2255 = vmatprep.mubr.bf16.mxu0 0
        %2256 = vmatmul.mubr.bf16.gmra.mrb[0].mxu0 %v2221
        %v2257 = vpop.f32.mrb[0].mxu0
        %v2258 = vadd.f32 %v2207, %v2257
        %v2259 = vpop.f32.mrb[0].mxu0
        %v2260 = vpop.f32.mrb[0].mxu0
        %v2261 = vadd.f32 %v2207, %v2260
        %v2262 = vpop.f32.mrb[0].mxu0
        %2263 = vdwg.mxu0
        %v2264 = vmax.f32 %v2258, 0.0
        %v2265 = vmax.f32 %v2261, 0.0
        %v2266 = vpack.c.bf16 %v2265, %v2264
        %v2267 = vld [vmem:[%s6] sm:$0xf]
        %v2268 = vld [vmem:[%s6 + $0x4] sm:$0xf]
        %v2269 = vld [vmem:[%s6 + $0x8] sm:$0xf]
        %v2270 = vld [vmem:[%s6 + $0xc] sm:$0xf]
        %v2271 = vld [vmem:[%s6 + $0x10] sm:$0xf]
        %v2272 = vld [vmem:[%s6 + $0x14] sm:$0xf]
        %v2273 = vld [vmem:[%s6 + $0x18] sm:$0xf]
        %v2274 = vld [vmem:[%s6 + $0x1c] sm:$0xf]
        %v2275 = vld [vmem:[%s6 + $0x20] sm:$0xf]
        %v2276 = vld [vmem:[%s6 + $0x24] sm:$0xf]
        %v2277 = vld [vmem:[%s6 + $0x28] sm:$0xf]
        %v2278 = vld [vmem:[%s6 + $0x2c] sm:$0xf]
        %v2279 = vld [vmem:[%s6 + $0x30] sm:$0xf]
        %v2280 = vld [vmem:[%s6 + $0x34] sm:$0xf]
        %v2281 = vlaneseq
        %v2282 = vshrl.u32 %v2281, 7
        %v2283 = vsub.s32 3, %v2282
        %v2284 = vrot.slane %v379, %v2283
        %v2299 = vunpack.c.l.b16 %v2267
        %v2300 = vunpack.c.l.b16 %v2268
        %v2301 = vunpack.c.l.b16 %v2269
        %v2302 = vunpack.c.l.b16 %v2270
        %v2303 = vunpack.c.l.b16 %v2271
        %v2304 = vunpack.c.l.b16 %v2272
        %v2305 = vunpack.c.l.b16 %v2273
        %v2306 = vunpack.c.l.b16 %v2274
        %v2307 = vunpack.c.l.b16 %v2275
        %v2308 = vunpack.c.l.b16 %v2276
        %v2309 = vunpack.c.l.b16 %v2277
        %v2310 = vunpack.c.l.b16 %v2278
        %v2311 = vunpack.c.l.b16 %v2279
        %v2312 = vunpack.c.l.b16 %v2280
        %v2313 = vpack.c.b16 %v2300, %v2299
        %v2314 = vpack.c.b16 %v2302, %v2301
        %v2315 = vpack.c.b16 %v2304, %v2303
        %v2316 = vpack.c.b16 %v2306, %v2305
        %v2317 = vpack.c.b16 %v2308, %v2307
        %v2318 = vpack.c.b16 %v2310, %v2309
        %v2319 = vpack.c.b16 %v2312, %v2311
        %vm2327 = vcmask 916480
        %v2329 = vsel %vm2327, %v2266, 0
        %2331 = vmatprep.subr.bf16.mxu0 0
        %2332 = vmatpush1.bf16.msra.mxu0 %v2313
        %2333 = vmatprep.subr.bf16.mxu0 0
        %2334 = vmatpush1.bf16.msra.mxu0 %v2314
        %2335 = vmatprep.subr.bf16.mxu0 0
        %2336 = vmatpush1.bf16.msra.mxu0 %v2315
        %2337 = vmatprep.subr.bf16.mxu0 0
        %2338 = vmatpush1.bf16.msra.mxu0 %v2316
        %2339 = vmatprep.subr.bf16.mxu0 0
        %2340 = vmatpush1.bf16.msra.mxu0 %v2317
        %2341 = vmatprep.subr.bf16.mxu0 0
        %2342 = vmatpush1.bf16.msra.mxu0 %v2318
        %2343 = vmatprep.subr.bf16.mxu0 0
        %2344 = vmatpush1.bf16.msra.mxu0 %v2319
        %2345 = vmatprep.subr.bf16.mxu0 0
        %2346 = vmatpush1.bf16.msra.mxu0 0
        %2347 = vmatprep.subr.bf16.mxu0 0
        %2348 = vmatpush1.bf16.msra.mxu0 0
        %2349 = vmatprep.subr.bf16.mxu0 0
        %2350 = vmatpush1.bf16.msra.mxu0 0
        %2351 = vmatprep.subr.bf16.mxu0 0
        %2352 = vmatpush1.bf16.msra.mxu0 0
        %2353 = vmatprep.subr.bf16.mxu0 0
        %2354 = vmatpush1.bf16.msra.mxu0 0
        %2355 = vmatprep.subr.bf16.mxu0 0
        %2356 = vmatpush1.bf16.msra.mxu0 0
        %2357 = vmatprep.subr.bf16.mxu0 0
        %2358 = vmatpush1.bf16.msra.mxu0 0
        %2359 = vmatprep.subr.bf16.mxu0 0
        %2360 = vmatpush1.bf16.msra.mxu0 0
        %2361 = vmatprep.subr.bf16.mxu0 0
        %2362 = vmatpush1.bf16.msra.mxu0 0
        %2363 = vmatprep.mubr.bf16.mxu0 0
        %2364 = vmatmul.mubr.bf16.gmra.mrb[0].mxu0 %v2329
        %v2365 = vpop.f32.mrb[0].mxu0
        %v2366 = vadd.f32 %v2284, %v2365
        %v2367 = vpop.f32.mrb[0].mxu0
        %v2368 = vpop.f32.mrb[0].mxu0
        %v2369 = vadd.f32 %v2284, %v2368
        %v2370 = vpop.f32.mrb[0].mxu0
        %2371 = vdwg.mxu0
        %2372 = vst [vmem:[%s353] sm:$0xff] %v2366
        %2373 = vst [vmem:[%s353 + $0x8] sm:$0xff] %v2369
        %s2374 = sand.u32 %s247, 1
        %s2375 = scalar_lea.sflag [#allocation3], %s2374
        %s2376 = sand.u32 %s247, 1
        %s2377 = smul.addr %s2376, 16
        %s2378 = scalar_lea.vmem [#allocation2], %s2377
        // Predicated region
        $region61: #{_fused_forward.1} parent=59 // pred_check
          %p2379 = pneg %p257
        $region62: #{_fused_forward.1} parent=59 // pred_check_branch
          %2381 = sbr.rel (%p2379) target = $region64
        $region63: #{_fused_forward.1} parent=59 // pred_region
          %s2382 = smul.u32 2, %s24
          %s2384 = ssub.s32 256, 256
          %2385 = vsyncadd %s2375, %s2384
          %s2386 = smul.addr %s2382, 128
          %s2387 = scalar_lea.hbm %s10, %s2386
          %s2388 = sshll.u32 %s2378, 4
          %s2389 = int_to_ptr.vmem [resolvable:$true] %s2388
          %2394 = dma.vmem_to_hbm [thread:$0]  %s2389, 256, %s2387, %s2375, 128, 128, 8
        $region64: #{_fused_forward.1} parent=59 // pred_fallthru
          _
      $region60: #{_fused_forward.1} parent=5 // pred_fallthru
        _
      %p2395 = scmp.le.s32.totalorder 2, %s19
      // Predicated region
      $region65: #{_fused_forward.1} parent=5 // pred_check
        %p2396 = pneg %p2395
      $region66: #{_fused_forward.1} parent=5 // pred_check_branch
        %2398 = sbr.rel (%p2396) target = $region68
      $region67: #{_fused_forward.1} parent=5 // pred_region
        %s2399 = ssub.s32 %s19, 2
        // Predicated region
        $region69: #{_fused_forward.1} parent=67 // pred_check
          %p2400 = pneg %p263
        $region70: #{_fused_forward.1} parent=67 // pred_check_branch
          %2402 = sbr.rel (%p2400) target = $region72
        $region71: #{_fused_forward.1} parent=67 // pred_region
          %s2403 = sand.u32 %s248, 1
          %s2404 = scalar_lea.sflag [#allocation3], %s2403
          %s2405 = sand.u32 %s248, 1
          %s2406 = smul.addr %s2405, 16
          %s2407 = scalar_lea.vmem [#allocation2], %s2406
          %2408 = dma.done %s2404, 256
        $region72: #{_fused_forward.1} parent=67 // pred_fallthru
          _
      $region68: #{_fused_forward.1} parent=5 // pred_fallthru
        _
    $region6: #{_fused_forward.1} parent=1 // loop_footer
      %s23 = sadd.s32 1, %s19
    $region7: #{_fused_forward.1} parent=1 // loop_footer_branch
      %18 = sbr.rel target = $region3
    $region8: #{_fused_forward.1} parent=1 // loop_exit
      _
    %2409 = vsyncpa [#allocation3], 1
    %s2410 = scalar_lea.sflag [#allocation3], 1
    %2411 = vsyncpa %s2410, 1

</llo_original>
